<compile_context>
chip_gen: v6e
topology: v6e:2x2x1
jax: 0.10.0
libtpu: 0.0.40
codegen_flags: <defaults>
</compile_context>

<pallas_src>
import numpy as np
import jax
import jax.numpy as jnp
from jax.experimental import pallas as pl
from jax.experimental.pallas import tpu as pltpu

# ------------------------- configuration -------------------------
STAGE = 4
IN_CH = 16
RES = 8
N_CLS = 10
MBDIS_GROUP = 32
MBDIS_N_CHAN = 1
CMAP_DIM = 128
LRELU_SLOPE = 0.2

CHW = IN_CH * RES * RES          # 1024
N_STEPS = 2                      # column-grid steps over the conv matrix
COL_BLK = CHW // N_STEPS         # 512 output columns per step (lane-aligned)


# ------------------------- fused Pallas kernel -------------------------
def _epilogue_kernel(x_ref, c_ref, t_ref, cb_ref, m_ref,
                     wd_ref, bd_ref, hm_ref, hb_ref, o_ref,
                     h_acc, std_sc):
    """Fused Epilogue forward, column-blocked over the conv output columns.

    Per grid step j (j over N_STEPS column blocks of size COL_BLK):
      x_ref : (N, CHW)          NCHW-flattened input, f32 (constant block, fetched once)
      c_ref : (N, n_cls)        one-hot labels (constant block)
      t_ref : (CHW, COL_BLK)    bf16 conv-as-matrix column block (EQ-scaled, real ch.)
      cb_ref: (1, COL_BLK)      conv bias for these columns
      m_ref : (1, COL_BLK)      std-channel contribution map for these columns
      wd_ref: (COL_BLK, C)      dense-weight row block (EQ-scaled, transposed)
      bd_ref: (1, C)            dense bias (constant block)
      hm_ref: (C, n_cls)        folded head matrix  wl @ wo^T  (1/sqrt(cmap) folded in)
      hb_ref: (1, n_cls)        folded head bias    bl @ wo^T  (1/sqrt(cmap) folded in)
      o_ref : (N, 1)            output (written only on the last step)
      h_acc : (N, C) f32 VMEM   dense accumulator
      std_sc: (1, 1) f32 VMEM   cached minibatch-std scalar
    """
    j = pl.program_id(0)
    x = x_ref[...]                                               # (N, CHW) f32

    # ---- MinibatchStdLayer (G == N, F == 1): per-element std over the batch,
    #      averaged over all elements -> a single scalar.  Compute once.
    @pl.when(j == 0)
    def _():
        mu = jnp.mean(x, axis=0, keepdims=True)
        d = x - mu
        var = jnp.mean(d * d, axis=0, keepdims=True)             # biased, matches torch
        std_elem = jnp.sqrt(var + 1e-8)                          # (1, CHW)
        std_sc[...] = jnp.mean(std_elem, axis=1, keepdims=True)  # (1, 1)
        h_acc[...] = jnp.zeros_like(h_acc)

    std = std_sc[...]                                            # (1, 1)

    # ---- EQConv2d(3x3, pad=1) column block as one bf16 matmul (+bias +std map),
    #      then LeakyReLU(0.2).
    y = jnp.dot(x.astype(jnp.bfloat16), t_ref[...],
                preferred_element_type=jnp.float32)              # (N, COL_BLK) f32
    y = y + cb_ref[...] + std * m_ref[...]
    y = jnp.where(y >= 0, y, LRELU_SLOPE * y)

    # ---- EQLinear(C*res^2 -> C): partial accumulation over this column block.
    h_acc[...] += jnp.dot(y, wd_ref[...], preferred_element_type=jnp.float32)

    # ---- finalize: dense bias + LReLU, folded cmap head, conditional product-sum.
    @pl.when(j == pl.num_programs(0) - 1)
    def _():
        h = h_acc[...] + bd_ref[...]
        h = jnp.where(h >= 0, h, LRELU_SLOPE * h)                # (N, C)
        t = jnp.dot(h, hm_ref[...],
                    preferred_element_type=jnp.float32) + hb_ref[...]   # (N, n_cls)
        o_ref[...] = jnp.sum(c_ref[...] * t, axis=1, keepdims=True)


# ------------------------- parameters -------------------------
def init_params(key):
    """Raw parameters stored exactly like PyTorch: (out, in, kh, kw) / (out, in)."""
    ks = jax.random.split(key, 7)
    cin_conv = IN_CH + MBDIS_N_CHAN
    return {
        "conv_w": jax.random.normal(ks[0], (IN_CH, cin_conv, 3, 3), jnp.float32),
        "conv_b": jax.random.normal(ks[1], (IN_CH,), jnp.float32) * 0.1,
        "dense_w": jax.random.normal(ks[2], (IN_CH, IN_CH * RES * RES), jnp.float32),
        "dense_b": jax.random.normal(ks[3], (IN_CH,), jnp.float32) * 0.1,
        "logits_w": jax.random.normal(ks[4], (CMAP_DIM, IN_CH), jnp.float32),
        "logits_b": jax.random.normal(ks[5], (CMAP_DIM,), jnp.float32) * 0.1,
        "onehot_w": jax.random.normal(ks[6], (CMAP_DIM, N_CLS), jnp.float32),
    }


def prepare_params(params):
    """One-time host-side (numpy) weight preparation — nothing here runs per call.

    Builds:
      * conv_mat (CHW, CHW) bf16: the 3x3/pad=1 conv over the REAL channels as a
        single matrix; rows indexed by input (ci,h',w') NCHW-flatten, columns by
        output (co,h,w) NCHW-flatten (PyTorch x.flatten(1) order preserved, so
        dense_w needs no column permutation).
      * conv_bias (1, CHW), std_map (1, CHW): additive vectors in the same column
        order; std_map is the border-masked sum of std-channel tap weights.
      * EQ-scaled, transposed dense weight; folded cmap head (M, b) with the
        1/sqrt(cmap_dim) normalization baked in.
    """
    cin_total = IN_CH + MBDIS_N_CHAN
    hw = RES * RES
    conv_scale = 1.0 / np.sqrt(cin_total * 3 * 3)                 # EQ fan-in scale
    w = np.asarray(params["conv_w"], np.float32) * conv_scale     # (Cout, Cin+1, 3, 3)

    conv_mat = np.zeros((IN_CH * hw, IN_CH * hw), np.float32)
    std_map = np.zeros((IN_CH * hw,), np.float32)
    ci_base = np.arange(IN_CH) * hw
    co_base = np.arange(IN_CH) * hw
    for h in range(RES):
        for wcol in range(RES):
            out_off = h * RES + wcol
            for ky in range(3):
                hi = h + ky - 1
                if not (0 <= hi < RES):
                    continue
                for kx in range(3):
                    wi = wcol + kx - 1
                    if not (0 <= wi < RES):
                        continue
                    in_off = hi * RES + wi
                    # real-channel taps -> conv matrix block (Cin, Cout)
                    conv_mat[np.ix_(ci_base + in_off, co_base + out_off)] = \
                        w[:, :IN_CH, ky, kx].T
                    # std-channel tap (constant value, zero-padded at borders)
                    std_map[co_base + out_off] += w[:, IN_CH, ky, kx]

    conv_bias = np.repeat(np.asarray(params["conv_b"], np.float32), hw)  # (co,h,w)

    dense_w = (np.asarray(params["dense_w"], np.float32)
               * (1.0 / np.sqrt(IN_CH * hw))).T                   # (CHW, C)

    # folded cmap head:  out = sum(c * (h @ M + b), 1)   (1/sqrt(cmap) folded in)
    wl = (np.asarray(params["logits_w"], np.float32)
          * (1.0 / np.sqrt(IN_CH))).T                             # (C, cmap)
    bl = np.asarray(params["logits_b"], np.float32).reshape(1, CMAP_DIM)
    wo = (np.asarray(params["onehot_w"], np.float32)
          * (1.0 / np.sqrt(N_CLS))).T                             # (n_cls, cmap)
    inv_sqrt_cmap = 1.0 / np.sqrt(CMAP_DIM)
    head_mat = (wl @ wo.T) * inv_sqrt_cmap                        # (C, n_cls)
    head_bias = (bl @ wo.T) * inv_sqrt_cmap                       # (1, n_cls)

    return {
        "conv_mat": jnp.asarray(conv_mat, jnp.bfloat16),          # 2 MiB, MXU-native
        "conv_bias": jnp.asarray(conv_bias.reshape(1, IN_CH * hw)),
        "std_map": jnp.asarray(std_map.reshape(1, IN_CH * hw)),
        "dense_w": jnp.asarray(dense_w),
        "dense_b": jnp.asarray(np.asarray(params["dense_b"], np.float32)
                               .reshape(1, IN_CH)),
        "head_mat": jnp.asarray(head_mat),
        "head_bias": jnp.asarray(head_bias),
    }


# ------------------------- forward wrapper -------------------------
@jax.jit
def epilogue_forward(prep, x, c):
    N, C, H, W = x.shape
    G = min(MBDIS_GROUP, N)
    assert G == N, "this kernel assumes the mbdis group covers the whole batch"
    assert C * H * W == CHW

    x_flat = x.reshape(N, CHW)               # free reshape (NCHW flatten)

    grid_spec = pltpu.PrefetchScalarGridSpec(
        num_scalar_prefetch=0,
        grid=(N_STEPS,),
        in_specs=[
            pl.BlockSpec((N, CHW), lambda j: (0, 0)),           # x (fetched once)
            pl.BlockSpec((N, N_CLS), lambda j: (0, 0)),         # c (fetched once)
            pl.BlockSpec((CHW, COL_BLK), lambda j: (0, j)),     # conv_mat column blk
            pl.BlockSpec((1, COL_BLK), lambda j: (0, j)),       # conv_bias cols
            pl.BlockSpec((1, COL_BLK), lambda j: (0, j)),       # std_map cols
            pl.BlockSpec((COL_BLK, IN_CH), lambda j: (j, 0)),   # dense_w row blk
            pl.BlockSpec((1, IN_CH), lambda j: (0, 0)),         # dense_b
            pl.BlockSpec((IN_CH, N_CLS), lambda j: (0, 0)),     # head_mat
            pl.BlockSpec((1, N_CLS), lambda j: (0, 0)),         # head_bias
        ],
        out_specs=pl.BlockSpec((N, 1), lambda j: (0, 0)),
        scratch_shapes=[
            pltpu.VMEM((N, IN_CH), jnp.float32),                # dense accumulator
            pltpu.VMEM((1, 1), jnp.float32),                    # cached mbdis std
        ],
    )

    out = pl.pallas_call(
        _epilogue_kernel,
        out_shape=jax.ShapeDtypeStruct((N, 1), jnp.float32),
        grid_spec=grid_spec,
        compiler_params=pltpu.CompilerParams(
            dimension_semantics=("arbitrary",)),
    )(x_flat, c,
      prep["conv_mat"], prep["conv_bias"], prep["std_map"],
      prep["dense_w"], prep["dense_b"],
      prep["head_mat"], prep["head_bias"])
    return out                                # (N, 1)


# ------------------------- driver -------------------------
if __name__ == "__main__":
    key = jax.random.PRNGKey(0)
    k_param, k_x, k_c = jax.random.split(key, 3)

    raw_params = init_params(k_param)
    prep = prepare_params(raw_params)          # one-time host-side weight prep

    N = 8
    x = jax.random.normal(k_x, (N, IN_CH, RES, RES), jnp.float32)   # (8, 16, 8, 8)
    labels = jax.random.randint(k_c, (N,), 0, N_CLS)
    c = jax.nn.one_hot(labels, N_CLS, dtype=jnp.float32)            # (8, 10)

    out = epilogue_forward(prep, x, c)
    out = jax.block_until_ready(out)
    assert out.shape == (N, 1) and out.dtype == jnp.float32
    assert bool(jnp.all(jnp.isfinite(out)))
    print("KERNEL_OK")
</pallas_src>

<mosaic_0001>
module attributes {stable_mosaic.version = 11 : i64} {
  func.func @_epilogue_kernel(%arg0: i32, %arg1: memref<8x1024xf32, #tpu.memory_space<vmem>>, %arg2: memref<8x10xf32, #tpu.memory_space<vmem>>, %arg3: memref<1024x512xbf16, #tpu.memory_space<vmem>>, %arg4: memref<1x512xf32, #tpu.memory_space<vmem>>, %arg5: memref<1x512xf32, #tpu.memory_space<vmem>>, %arg6: memref<512x16xf32, #tpu.memory_space<vmem>>, %arg7: memref<1x16xf32, #tpu.memory_space<vmem>>, %arg8: memref<16x10xf32, #tpu.memory_space<vmem>>, %arg9: memref<1x10xf32, #tpu.memory_space<vmem>>, %arg10: memref<8x1xf32, #tpu.memory_space<vmem>>, %arg11: memref<8x16xf32, #tpu.memory_space<vmem>>, %arg12: memref<1x1xf32, #tpu.memory_space<vmem>>) attributes {dimension_semantics = [#tpu.dimension_semantics<arbitrary>], iteration_bounds = array<i64: 2>, scalar_prefetch = 0 : i64, scratch_operands = 2 : i64, tpu.core_type = #tpu.core_type<tc>, window_params = [{pipeline_mode = #tpu.pipeline_mode<synchronous>, transform_indices = @transform_0, window_bounds = array<i64: 8, 1024>}, {pipeline_mode = #tpu.pipeline_mode<synchronous>, transform_indices = @transform_1, window_bounds = array<i64: 8, 10>}, {transform_indices = @transform_2, window_bounds = array<i64: 1024, 512>}, {transform_indices = @transform_3, window_bounds = array<i64: 1, 512>}, {transform_indices = @transform_4, window_bounds = array<i64: 1, 512>}, {transform_indices = @transform_5, window_bounds = array<i64: 512, 16>}, {pipeline_mode = #tpu.pipeline_mode<synchronous>, transform_indices = @transform_6, window_bounds = array<i64: 1, 16>}, {pipeline_mode = #tpu.pipeline_mode<synchronous>, transform_indices = @transform_7, window_bounds = array<i64: 16, 10>}, {pipeline_mode = #tpu.pipeline_mode<synchronous>, transform_indices = @transform_8, window_bounds = array<i64: 1, 10>}, {pipeline_mode = #tpu.pipeline_mode<synchronous>, transform_indices = @transform_9, window_bounds = array<i64: 8, 1>}]} {
    %c0 = arith.constant 0 : index
    %c0_0 = arith.constant 0 : index
    %0 = vector.load %arg1[%c0, %c0_0] : memref<8x1024xf32, #tpu.memory_space<vmem>>, vector<8x1024xf32>
    %c0_i32 = arith.constant 0 : i32
    %1 = arith.cmpi eq, %arg0, %c0_i32 : i32
    %2 = arith.extui %1 : i1 to i32
    %c0_i32_1 = arith.constant 0 : i32
    %3 = arith.cmpi ne, %2, %c0_i32_1 : i32
    scf.if %3 {
      %cst_20 = arith.constant dense<0.000000e+00> : vector<1024xf32>
      %29 = vector.multi_reduction <add>, %0, %cst_20 [0] : vector<8x1024xf32> to vector<1024xf32>
      %30 = vector.shape_cast %29 : vector<1024xf32> to vector<1x1024xf32>
      %cst_21 = arith.constant 8.000000e+00 : f32
      %31 = vector.broadcast %cst_21 : f32 to vector<1x1024xf32>
      %32 = arith.divf %30, %31 : vector<1x1024xf32>
      %33 = vector.broadcast %32 : vector<1x1024xf32> to vector<8x1024xf32>
      %34 = arith.subf %0, %33 : vector<8x1024xf32>
      %35 = arith.mulf %34, %34 : vector<8x1024xf32>
      %cst_22 = arith.constant dense<0.000000e+00> : vector<1024xf32>
      %36 = vector.multi_reduction <add>, %35, %cst_22 [0] : vector<8x1024xf32> to vector<1024xf32>
      %37 = vector.shape_cast %36 : vector<1024xf32> to vector<1x1024xf32>
      %cst_23 = arith.constant 8.000000e+00 : f32
      %38 = vector.broadcast %cst_23 : f32 to vector<1x1024xf32>
      %39 = arith.divf %37, %38 : vector<1x1024xf32>
      %cst_24 = arith.constant 9.99999993E-9 : f32
      %40 = vector.broadcast %cst_24 : f32 to vector<1x1024xf32>
      %41 = arith.addf %39, %40 : vector<1x1024xf32>
      %42 = math.sqrt %41 : vector<1x1024xf32>
      %cst_25 = arith.constant dense<0.000000e+00> : vector<1xf32>
      %43 = vector.multi_reduction <add>, %42, %cst_25 [1] : vector<1x1024xf32> to vector<1xf32>
      %44 = vector.shape_cast %43 : vector<1xf32> to vector<1x1xf32>
      %cst_26 = arith.constant 1.024000e+03 : f32
      %45 = vector.broadcast %cst_26 : f32 to vector<1x1xf32>
      %46 = arith.divf %44, %45 : vector<1x1xf32>
      %c0_27 = arith.constant 0 : index
      %c0_28 = arith.constant 0 : index
      %47 = vector.load %arg12[%c0_27, %c0_28] : memref<1x1xf32, #tpu.memory_space<vmem>>, vector<1x1xf32>
      tpu.vector_store %arg12[%c0_27, %c0_28], %46 {strides = array<i32>} : memref<1x1xf32, #tpu.memory_space<vmem>>, vector<1x1xf32>,
      %cst_29 = arith.constant 0.000000e+00 : f32
      %48 = vector.broadcast %cst_29 : f32 to vector<8x16xf32>
      %c0_30 = arith.constant 0 : index
      %c0_31 = arith.constant 0 : index
      %49 = vector.load %arg11[%c0_30, %c0_31] : memref<8x16xf32, #tpu.memory_space<vmem>>, vector<8x16xf32>
      tpu.vector_store %arg11[%c0_30, %c0_31], %48 {strides = array<i32>} : memref<8x16xf32, #tpu.memory_space<vmem>>, vector<8x16xf32>,
    } else {
    }
    %c0_2 = arith.constant 0 : index
    %c0_3 = arith.constant 0 : index
    %4 = vector.load %arg12[%c0_2, %c0_3] : memref<1x1xf32, #tpu.memory_space<vmem>>, vector<1x1xf32>
    %5 = arith.truncf %0 : vector<8x1024xf32> to vector<8x1024xbf16>
    %c0_4 = arith.constant 0 : index
    %c0_5 = arith.constant 0 : index
    %6 = vector.load %arg3[%c0_4, %c0_5] : memref<1024x512xbf16, #tpu.memory_space<vmem>>, vector<1024x512xbf16>
    %cst = arith.constant dense<0.000000e+00> : vector<8x512xf32>
    %7 = tpu.matmul %5, %6, %cst {dimension_numbers = #tpu.dot_dimension_numbers<[1], [0], [0], [1], [0, 0, 1, 1], [], []>} : vector<8x1024xbf16>, vector<1024x512xbf16>, vector<8x512xf32> -> vector<8x512xf32>
    %c0_6 = arith.constant 0 : index
    %c0_7 = arith.constant 0 : index
    %8 = vector.load %arg4[%c0_6, %c0_7] : memref<1x512xf32, #tpu.memory_space<vmem>>, vector<1x512xf32>
    %9 = vector.broadcast %8 : vector<1x512xf32> to vector<8x512xf32>
    %10 = arith.addf %7, %9 : vector<8x512xf32>
    %c0_8 = arith.constant 0 : index
    %c0_9 = arith.constant 0 : index
    %11 = vector.load %arg5[%c0_8, %c0_9] : memref<1x512xf32, #tpu.memory_space<vmem>>, vector<1x512xf32>
    %12 = vector.broadcast %4 : vector<1x1xf32> to vector<1x512xf32>
    %13 = arith.mulf %12, %11 : vector<1x512xf32>
    %14 = vector.broadcast %13 : vector<1x512xf32> to vector<8x512xf32>
    %15 = arith.addf %10, %14 : vector<8x512xf32>
    %cst_10 = arith.constant 0.000000e+00 : f32
    %16 = vector.broadcast %cst_10 : f32 to vector<8x512xf32>
    %17 = arith.cmpf oge, %15, %16 : vector<8x512xf32>
    %cst_11 = arith.constant 2.000000e-01 : f32
    %18 = vector.broadcast %cst_11 : f32 to vector<8x512xf32>
    %19 = arith.mulf %18, %15 : vector<8x512xf32>
    %20 = arith.select %17, %15, %19 : vector<8x512xi1>, vector<8x512xf32>
    %c0_12 = arith.constant 0 : index
    %c0_13 = arith.constant 0 : index
    %21 = vector.load %arg11[%c0_12, %c0_13] : memref<8x16xf32, #tpu.memory_space<vmem>>, vector<8x16xf32>
    %c0_14 = arith.constant 0 : index
    %c0_15 = arith.constant 0 : index
    %22 = vector.load %arg6[%c0_14, %c0_15] : memref<512x16xf32, #tpu.memory_space<vmem>>, vector<512x16xf32>
    %cst_16 = arith.constant dense<0.000000e+00> : vector<8x16xf32>
    %23 = tpu.matmul %20, %22, %cst_16 {dimension_numbers = #tpu.dot_dimension_numbers<[1], [0], [0], [1], [0, 0, 1, 1], [], []>} : vector<8x512xf32>, vector<512x16xf32>, vector<8x16xf32> -> vector<8x16xf32>
    %24 = arith.addf %21, %23 : vector<8x16xf32>
    %c0_17 = arith.constant 0 : index
    %c0_18 = arith.constant 0 : index
    %25 = vector.load %arg11[%c0_17, %c0_18] : memref<8x16xf32, #tpu.memory_space<vmem>>, vector<8x16xf32>
    tpu.vector_store %arg11[%c0_17, %c0_18], %24 {strides = array<i32>} : memref<8x16xf32, #tpu.memory_space<vmem>>, vector<8x16xf32>,
    %c1_i32 = arith.constant 1 : i32
    %26 = arith.cmpi eq, %arg0, %c1_i32 : i32
    %27 = arith.extui %26 : i1 to i32
    %c0_i32_19 = arith.constant 0 : i32
    %28 = arith.cmpi ne, %27, %c0_i32_19 : i32
    scf.if %28 {
      %c0_20 = arith.constant 0 : index
      %c0_21 = arith.constant 0 : index
      %29 = vector.load %arg11[%c0_20, %c0_21] : memref<8x16xf32, #tpu.memory_space<vmem>>, vector<8x16xf32>
      %c0_22 = arith.constant 0 : index
      %c0_23 = arith.constant 0 : index
      %30 = vector.load %arg7[%c0_22, %c0_23] : memref<1x16xf32, #tpu.memory_space<vmem>>, vector<1x16xf32>
      %31 = vector.broadcast %30 : vector<1x16xf32> to vector<8x16xf32>
      %32 = arith.addf %29, %31 : vector<8x16xf32>
      %cst_24 = arith.constant 0.000000e+00 : f32
      %33 = vector.broadcast %cst_24 : f32 to vector<8x16xf32>
      %34 = arith.cmpf oge, %32, %33 : vector<8x16xf32>
      %cst_25 = arith.constant 2.000000e-01 : f32
      %35 = vector.broadcast %cst_25 : f32 to vector<8x16xf32>
      %36 = arith.mulf %35, %32 : vector<8x16xf32>
      %37 = arith.select %34, %32, %36 : vector<8x16xi1>, vector<8x16xf32>
      %c0_26 = arith.constant 0 : index
      %c0_27 = arith.constant 0 : index
      %38 = vector.load %arg8[%c0_26, %c0_27] : memref<16x10xf32, #tpu.memory_space<vmem>>, vector<16x10xf32>
      %cst_28 = arith.constant dense<0.000000e+00> : vector<8x10xf32>
      %39 = tpu.matmul %37, %38, %cst_28 {dimension_numbers = #tpu.dot_dimension_numbers<[1], [0], [0], [1], [0, 0, 1, 1], [], []>} : vector<8x16xf32>, vector<16x10xf32>, vector<8x10xf32> -> vector<8x10xf32>
      %c0_29 = arith.constant 0 : index
      %c0_30 = arith.constant 0 : index
      %40 = vector.load %arg9[%c0_29, %c0_30] : memref<1x10xf32, #tpu.memory_space<vmem>>, vector<1x10xf32>
      %41 = vector.broadcast %40 : vector<1x10xf32> to vector<8x10xf32>
      %42 = arith.addf %39, %41 : vector<8x10xf32>
      %c0_31 = arith.constant 0 : index
      %c0_32 = arith.constant 0 : index
      %43 = vector.load %arg2[%c0_31, %c0_32] : memref<8x10xf32, #tpu.memory_space<vmem>>, vector<8x10xf32>
      %44 = arith.mulf %43, %42 : vector<8x10xf32>
      %cst_33 = arith.constant dense<0.000000e+00> : vector<8xf32>
      %45 = vector.multi_reduction <add>, %44, %cst_33 [1] : vector<8x10xf32> to vector<8xf32>
      %46 = vector.shape_cast %45 : vector<8xf32> to vector<8x1xf32>
      %c0_34 = arith.constant 0 : index
      %c0_35 = arith.constant 0 : index
      %47 = vector.load %arg10[%c0_34, %c0_35] : memref<8x1xf32, #tpu.memory_space<vmem>>, vector<8x1xf32>
      tpu.vector_store %arg10[%c0_34, %c0_35], %46 {strides = array<i32>} : memref<8x1xf32, #tpu.memory_space<vmem>>, vector<8x1xf32>,
    } else {
    }
    return
  }
  func.func @transform_0(%arg0: i32) -> (i32, i32) {
    %c0_i32 = arith.constant 0 : i32
    %c0_i32_0 = arith.constant 0 : i32
    %c0_i32_1 = arith.constant 0 : i32
    return %c0_i32, %c0_i32_0 : i32, i32
  }
  func.func @transform_1(%arg0: i32) -> (i32, i32) {
    %c0_i32 = arith.constant 0 : i32
    %c0_i32_0 = arith.constant 0 : i32
    %c0_i32_1 = arith.constant 0 : i32
    return %c0_i32, %c0_i32_0 : i32, i32
  }
  func.func @transform_2(%arg0: i32) -> (i32, i32) {
    %c0_i32 = arith.constant 0 : i32
    %c0_i32_0 = arith.constant 0 : i32
    return %c0_i32, %arg0 : i32, i32
  }
  func.func @transform_3(%arg0: i32) -> (i32, i32) {
    %c0_i32 = arith.constant 0 : i32
    %c0_i32_0 = arith.constant 0 : i32
    return %c0_i32, %arg0 : i32, i32
  }
  func.func @transform_4(%arg0: i32) -> (i32, i32) {
    %c0_i32 = arith.constant 0 : i32
    %c0_i32_0 = arith.constant 0 : i32
    return %c0_i32, %arg0 : i32, i32
  }
  func.func @transform_5(%arg0: i32) -> (i32, i32) {
    %c0_i32 = arith.constant 0 : i32
    %c0_i32_0 = arith.constant 0 : i32
    return %arg0, %c0_i32 : i32, i32
  }
  func.func @transform_6(%arg0: i32) -> (i32, i32) {
    %c0_i32 = arith.constant 0 : i32
    %c0_i32_0 = arith.constant 0 : i32
    %c0_i32_1 = arith.constant 0 : i32
    return %c0_i32, %c0_i32_0 : i32, i32
  }
  func.func @transform_7(%arg0: i32) -> (i32, i32) {
    %c0_i32 = arith.constant 0 : i32
    %c0_i32_0 = arith.constant 0 : i32
    %c0_i32_1 = arith.constant 0 : i32
    return %c0_i32, %c0_i32_0 : i32, i32
  }
  func.func @transform_8(%arg0: i32) -> (i32, i32) {
    %c0_i32 = arith.constant 0 : i32
    %c0_i32_0 = arith.constant 0 : i32
    %c0_i32_1 = arith.constant 0 : i32
    return %c0_i32, %c0_i32_0 : i32, i32
  }
  func.func @transform_9(%arg0: i32) -> (i32, i32) {
    %c0_i32 = arith.constant 0 : i32
    %c0_i32_0 = arith.constant 0 : i32
    %c0_i32_1 = arith.constant 0 : i32
    return %c0_i32, %c0_i32_0 : i32, i32
  }
}

</mosaic_0001>

<llo_original>
// kernel: epilogue_forward.1
$region0: #{epilogue_forward.1}
  #allocation0 [shape = 'u32[]', space=smem, size = 0x4, offset = 0x4, fixed_abs, tag = 'smem constant byte address 0x4 - core index']
  #allocation1 [shape = 'u32[144,128]{1,0:T(1,128)}', space=vmem, size = 0x12000, scoped, tag = 'internal scratch']
  #allocation2 [shape = 'f32[8,16]{1,0:T(8,128)}', space=vmem, size = 0x1000, scoped, tag = 'scratch operand']
  #allocation3 [shape = 'f32[1,1]{1,0:T(1,128)}', space=vmem, size = 0x200, scoped, tag = 'scratch operand']
  %s0 = inlined_call_operand.vmem [shape: f32[8,1024], index: 0, kind: input, shape index: {}]
  %s1 = inlined_call_operand.hbm [shape: f32[8,10], index: 1, kind: input, shape index: {}]
  %s2 = inlined_call_operand.hbm [shape: bf16[1024,1024], index: 2, kind: input, shape index: {}]
  %s3 = inlined_call_operand.hbm [shape: f32[1,1024], index: 3, kind: input, shape index: {}]
  %s4 = inlined_call_operand.hbm [shape: f32[1,1024], index: 4, kind: input, shape index: {}]
  %s5 = inlined_call_operand.vmem [shape: f32[1024,16], index: 5, kind: input, shape index: {}]
  %s6 = inlined_call_operand.hbm [shape: f32[1,16], index: 6, kind: input, shape index: {}]
  %s7 = inlined_call_operand.hbm [shape: f32[16,10], index: 7, kind: input, shape index: {}]
  %s8 = inlined_call_operand.hbm [shape: f32[1,10], index: 8, kind: input, shape index: {}]
  %s9 = inlined_call_operand.vmem [shape: f32[8,1], index: 9, kind: output, shape index: {}]
  %s10 = sld [smem:[#allocation0]]
  $region105: #{epilogue_forward.1} parent=0
    _
  %s12 = ssub.s32 1, %s10
  %s13 = scalar_select 0, %s12, %s10
  $region1: #{epilogue_forward.1} parent=0
    #allocation4 [shape = 'u8[4096]{0}', space=vmem, size = 0x1000, scoped, tag = 'input window, operand 1, single buffered']
    #allocation5 [shape = 's32[2]{0}', space=sflag, size = 0x8, scoped, tag = 'scoped memory for epilogue_forward.1']
    #allocation6 [shape = 'u8[2097152]{0}', space=vmem, size = 0x200000, scoped, tag = 'input window, operand 2']
    #allocation7 [shape = 's32[2]{0}', space=sflag, size = 0x8, scoped, tag = 'scoped memory for epilogue_forward.1']
    #allocation8 [shape = 'u8[4096]{0}', space=vmem, size = 0x1000, scoped, tag = 'input window, operand 3']
    #allocation9 [shape = 'u8[4096]{0}', space=vmem, size = 0x1000, scoped, tag = 'input window, operand 4']
    #allocation10 [shape = 's32[2]{0}', space=sflag, size = 0x8, scoped, tag = 'scoped memory for epilogue_forward.1']
    #allocation11 [shape = 'u8[512]{0}', space=vmem, size = 0x400, scoped, tag = 'input window, operand 6, single buffered']
    #allocation12 [shape = 'u8[8192]{0}', space=vmem, size = 0x2000, scoped, tag = 'input window, operand 7, single buffered']
    #allocation13 [shape = 's32[1]{0}', space=sflag, size = 0x4, scoped, tag = 'scoped memory for epilogue_forward.1']
    #allocation14 [shape = 'u8[512]{0}', space=vmem, size = 0x400, scoped, tag = 'input window, operand 8, single buffered']
    %14 = vsyncpa [#allocation5], 0
    %15 = vsyncpa [#allocation7], 0
    %s16 = scalar_lea.sflag [#allocation7], 1
    %17 = vsyncpa %s16, 0
    %18 = vsyncpa [#allocation10], 0
    %s19 = scalar_lea.sflag [#allocation10], 1
    %20 = vsyncpa %s19, 0
    %21 = vsyncpa [#allocation13], 0
    loop: start=0, step=1, limit=4
    $region2: #{epilogue_forward.1} parent=1 // loop_pre_header
      _
    $region3: #{epilogue_forward.1} parent=1 // loop_header
      %s23 = sphi 0, %s27
      %p24 = scmp.ge.s32.totalorder %s23, 4
      %s31 = sphi 0, %s31
      %s33 = sphi 0, %s31
      %s34 = sphi 0, %s33
      %s48 = sphi 0, %s34
      %s52 = sphi 0, %s52
      %s54 = sphi 0, %s52
      %s55 = sphi 0, %s54
      %s69 = sphi 0, %s55
      %s75 = sphi 0, %s77
      %s78 = sphi 0, %s75
      %s79 = sphi 0, %s78
      %s95 = sphi 0, %s79
      %s101 = sphi 0, %s103
      %s104 = sphi 0, %s101
      %s105 = sphi 0, %s104
      %s121 = sphi 0, %s105
      %s127 = sphi 0, %s129
      %s130 = sphi 0, %s127
      %s131 = sphi 0, %s130
      %s147 = sphi 0, %s131
      %s153 = sphi 0, %s155
      %s156 = sphi 0, %s153
      %s157 = sphi 0, %s156
      %s173 = sphi 0, %s157
      %s177 = sphi 0, %s177
      %s179 = sphi 0, %s177
      %s180 = sphi 0, %s179
      %s194 = sphi 0, %s180
      %s198 = sphi 0, %s198
      %s200 = sphi 0, %s198
      %s201 = sphi 0, %s200
      %s215 = sphi 0, %s201
      %s219 = sphi 0, %s219
      %s221 = sphi 0, %s219
      %s222 = sphi 0, %s221
      %s236 = sphi 0, %s222
      %s240 = sphi 0, %s240
      %s242 = sphi 0, %s240
      %s243 = sphi 0, %s242
      %s257 = sphi 0, %s243
    $region4: #{epilogue_forward.1} parent=1 // loop_header_branch
      %26 = sbr.rel (%p24) target = $region8
    $region5: #{epilogue_forward.1} parent=1 // loop_body
      %s28 = ssub.s32 %s23, 1
      %s29 = ssub.s32 %s23, 2
      %s30 = sadd.s32 %s23, 1
      %s32 = sadd.s32 %s31, 1
      %p35 = scmp.eq.s32.totalorder %s23, 1
      %p36 = scmp.ne.s32.totalorder %s31, %s33
      %p37 = scmp.eq.s32.totalorder %s23, 0
      %p38 = por %p36, %p37
      %p39 = scmp.ne.s32.totalorder %s31, %s33
      %p40 = scmp.eq.s32.totalorder %s28, 1
      %p41 = por %p39, %p40
      %p42 = scmp.ne.s32.totalorder %s33, %s34
      %p43 = scmp.eq.s32.totalorder %s28, 0
      %p44 = por %p42, %p43
      %p45 = scmp.ne.s32.totalorder %s33, %s34
      %p46 = scmp.eq.s32.totalorder %s29, 1
      %p47 = por %p45, %p46
      %p49 = scmp.ne.s32.totalorder %s34, %s48
      %p50 = scmp.eq.s32.totalorder %s29, 0
      %p51 = por %p49, %p50
      %s53 = sadd.s32 %s52, 1
      %p56 = scmp.eq.s32.totalorder %s23, 1
      %p57 = scmp.ne.s32.totalorder %s52, %s54
      %p58 = scmp.eq.s32.totalorder %s23, 0
      %p59 = por %p57, %p58
      %p60 = scmp.ne.s32.totalorder %s52, %s54
      %p61 = scmp.eq.s32.totalorder %s28, 1
      %p62 = por %p60, %p61
      %p63 = scmp.ne.s32.totalorder %s54, %s55
      %p64 = scmp.eq.s32.totalorder %s28, 0
      %p65 = por %p63, %p64
      %p66 = scmp.ne.s32.totalorder %s54, %s55
      %p67 = scmp.eq.s32.totalorder %s29, 1
      %p68 = por %p66, %p67
      %p70 = scmp.ne.s32.totalorder %s55, %s69
      %p71 = scmp.eq.s32.totalorder %s29, 0
      %p72 = por %p70, %p71
      %s73 = ssub.s32 %s23, %s30
      %p74 = scmp.eq.s32.totalorder %s73, 0
      %s76 = sadd.s32 %s75, 1
      %s77 = scalar_select %p74, %s75, %s76
      %p80 = pneg %p74
      %p81 = scmp.eq.s32.totalorder %s23, 1
      %p82 = por %p80, %p81
      %p83 = scmp.ne.s32.totalorder %s75, %s78
      %p84 = scmp.eq.s32.totalorder %s23, 0
      %p85 = por %p83, %p84
      %p86 = scmp.ne.s32.totalorder %s75, %s78
      %p87 = scmp.eq.s32.totalorder %s28, 1
      %p88 = por %p86, %p87
      %p89 = scmp.ne.s32.totalorder %s78, %s79
      %p90 = scmp.eq.s32.totalorder %s28, 0
      %p91 = por %p89, %p90
      %p92 = scmp.ne.s32.totalorder %s78, %s79
      %p93 = scmp.eq.s32.totalorder %s29, 1
      %p94 = por %p92, %p93
      %p96 = scmp.ne.s32.totalorder %s79, %s95
      %p97 = scmp.eq.s32.totalorder %s29, 0
      %p98 = por %p96, %p97
      %s99 = ssub.s32 %s23, %s30
      %p100 = scmp.eq.s32.totalorder %s99, 0
      %s102 = sadd.s32 %s101, 1
      %s103 = scalar_select %p100, %s101, %s102
      %p106 = pneg %p100
      %p107 = scmp.eq.s32.totalorder %s23, 1
      %p108 = por %p106, %p107
      %p109 = scmp.ne.s32.totalorder %s101, %s104
      %p110 = scmp.eq.s32.totalorder %s23, 0
      %p111 = por %p109, %p110
      %p112 = scmp.ne.s32.totalorder %s101, %s104
      %p113 = scmp.eq.s32.totalorder %s28, 1
      %p114 = por %p112, %p113
      %p115 = scmp.ne.s32.totalorder %s104, %s105
      %p116 = scmp.eq.s32.totalorder %s28, 0
      %p117 = por %p115, %p116
      %p118 = scmp.ne.s32.totalorder %s104, %s105
      %p119 = scmp.eq.s32.totalorder %s29, 1
      %p120 = por %p118, %p119
      %p122 = scmp.ne.s32.totalorder %s105, %s121
      %p123 = scmp.eq.s32.totalorder %s29, 0
      %p124 = por %p122, %p123
      %s125 = ssub.s32 %s23, %s30
      %p126 = scmp.eq.s32.totalorder %s125, 0
      %s128 = sadd.s32 %s127, 1
      %s129 = scalar_select %p126, %s127, %s128
      %p132 = pneg %p126
      %p133 = scmp.eq.s32.totalorder %s23, 1
      %p134 = por %p132, %p133
      %p135 = scmp.ne.s32.totalorder %s127, %s130
      %p136 = scmp.eq.s32.totalorder %s23, 0
      %p137 = por %p135, %p136
      %p138 = scmp.ne.s32.totalorder %s127, %s130
      %p139 = scmp.eq.s32.totalorder %s28, 1
      %p140 = por %p138, %p139
      %p141 = scmp.ne.s32.totalorder %s130, %s131
      %p142 = scmp.eq.s32.totalorder %s28, 0
      %p143 = por %p141, %p142
      %p144 = scmp.ne.s32.totalorder %s130, %s131
      %p145 = scmp.eq.s32.totalorder %s29, 1
      %p146 = por %p144, %p145
      %p148 = scmp.ne.s32.totalorder %s131, %s147
      %p149 = scmp.eq.s32.totalorder %s29, 0
      %p150 = por %p148, %p149
      %s151 = ssub.s32 %s23, %s30
      %p152 = scmp.eq.s32.totalorder %s151, 0
      %s154 = sadd.s32 %s153, 1
      %s155 = scalar_select %p152, %s153, %s154
      %p158 = pneg %p152
      %p159 = scmp.eq.s32.totalorder %s23, 1
      %p160 = por %p158, %p159
      %p161 = scmp.ne.s32.totalorder %s153, %s156
      %p162 = scmp.eq.s32.totalorder %s23, 0
      %p163 = por %p161, %p162
      %p164 = scmp.ne.s32.totalorder %s153, %s156
      %p165 = scmp.eq.s32.totalorder %s28, 1
      %p166 = por %p164, %p165
      %p167 = scmp.ne.s32.totalorder %s156, %s157
      %p168 = scmp.eq.s32.totalorder %s28, 0
      %p169 = por %p167, %p168
      %p170 = scmp.ne.s32.totalorder %s156, %s157
      %p171 = scmp.eq.s32.totalorder %s29, 1
      %p172 = por %p170, %p171
      %p174 = scmp.ne.s32.totalorder %s157, %s173
      %p175 = scmp.eq.s32.totalorder %s29, 0
      %p176 = por %p174, %p175
      %s178 = sadd.s32 %s177, 1
      %p181 = scmp.eq.s32.totalorder %s23, 1
      %p182 = scmp.ne.s32.totalorder %s177, %s179
      %p183 = scmp.eq.s32.totalorder %s23, 0
      %p184 = por %p182, %p183
      %p185 = scmp.ne.s32.totalorder %s177, %s179
      %p186 = scmp.eq.s32.totalorder %s28, 1
      %p187 = por %p185, %p186
      %p188 = scmp.ne.s32.totalorder %s179, %s180
      %p189 = scmp.eq.s32.totalorder %s28, 0
      %p190 = por %p188, %p189
      %p191 = scmp.ne.s32.totalorder %s179, %s180
      %p192 = scmp.eq.s32.totalorder %s29, 1
      %p193 = por %p191, %p192
      %p195 = scmp.ne.s32.totalorder %s180, %s194
      %p196 = scmp.eq.s32.totalorder %s29, 0
      %p197 = por %p195, %p196
      %s199 = sadd.s32 %s198, 1
      %p202 = scmp.eq.s32.totalorder %s23, 1
      %p203 = scmp.ne.s32.totalorder %s198, %s200
      %p204 = scmp.eq.s32.totalorder %s23, 0
      %p205 = por %p203, %p204
      %p206 = scmp.ne.s32.totalorder %s198, %s200
      %p207 = scmp.eq.s32.totalorder %s28, 1
      %p208 = por %p206, %p207
      %p209 = scmp.ne.s32.totalorder %s200, %s201
      %p210 = scmp.eq.s32.totalorder %s28, 0
      %p211 = por %p209, %p210
      %p212 = scmp.ne.s32.totalorder %s200, %s201
      %p213 = scmp.eq.s32.totalorder %s29, 1
      %p214 = por %p212, %p213
      %p216 = scmp.ne.s32.totalorder %s201, %s215
      %p217 = scmp.eq.s32.totalorder %s29, 0
      %p218 = por %p216, %p217
      %s220 = sadd.s32 %s219, 1
      %p223 = scmp.eq.s32.totalorder %s23, 1
      %p224 = scmp.ne.s32.totalorder %s219, %s221
      %p225 = scmp.eq.s32.totalorder %s23, 0
      %p226 = por %p224, %p225
      %p227 = scmp.ne.s32.totalorder %s219, %s221
      %p228 = scmp.eq.s32.totalorder %s28, 1
      %p229 = por %p227, %p228
      %p230 = scmp.ne.s32.totalorder %s221, %s222
      %p231 = scmp.eq.s32.totalorder %s28, 0
      %p232 = por %p230, %p231
      %p233 = scmp.ne.s32.totalorder %s221, %s222
      %p234 = scmp.eq.s32.totalorder %s29, 1
      %p235 = por %p233, %p234
      %p237 = scmp.ne.s32.totalorder %s222, %s236
      %p238 = scmp.eq.s32.totalorder %s29, 0
      %p239 = por %p237, %p238
      %s241 = sadd.s32 %s240, 1
      %p244 = scmp.eq.s32.totalorder %s23, 1
      %p245 = scmp.ne.s32.totalorder %s240, %s242
      %p246 = scmp.eq.s32.totalorder %s23, 0
      %p247 = por %p245, %p246
      %p248 = scmp.ne.s32.totalorder %s240, %s242
      %p249 = scmp.eq.s32.totalorder %s28, 1
      %p250 = por %p248, %p249
      %p251 = scmp.ne.s32.totalorder %s242, %s243
      %p252 = scmp.eq.s32.totalorder %s28, 0
      %p253 = por %p251, %p252
      %p254 = scmp.ne.s32.totalorder %s242, %s243
      %p255 = scmp.eq.s32.totalorder %s29, 1
      %p256 = por %p254, %p255
      %p258 = scmp.ne.s32.totalorder %s243, %s257
      %p259 = scmp.eq.s32.totalorder %s29, 0
      %p260 = por %p258, %p259
      %p261 = scmp.le.s32.totalorder 1, %s23
      %p262 = scmp.lt.s32.totalorder %s23, 3
      %p263 = pnand %p261, %p262
      %p264 = pneg %p263
      // Predicated region
      $region9: #{epilogue_forward.1} parent=5 // pred_check
        _
      $region10: #{epilogue_forward.1} parent=5 // pred_check_branch
        %266 = sbr.rel (%p263) target = $region12
      $region11: #{epilogue_forward.1} parent=5 // pred_region
        %s267 = ssub.s32 %s23, 1
        // Predicated region
        $region13: #{epilogue_forward.1} parent=11 // pred_check
          %p268 = pneg %p44
        $region14: #{epilogue_forward.1} parent=11 // pred_check_branch
          %270 = sbr.rel (%p268) target = $region16
        $region15: #{epilogue_forward.1} parent=11 // pred_region
          _
        $region16: #{epilogue_forward.1} parent=11 // pred_fallthru
          _
        // Predicated region
        $region17: #{epilogue_forward.1} parent=11 // pred_check
          %p271 = pneg %p65
        $region18: #{epilogue_forward.1} parent=11 // pred_check_branch
          %273 = sbr.rel (%p271) target = $region20
        $region19: #{epilogue_forward.1} parent=11 // pred_region
          %s275 = ssub.s32 128, 128
          %276 = vsyncadd [#allocation5], %s275
          %s278 = sshll.u32 [#allocation4], 4
          %s279 = int_to_ptr.vmem [resolvable:$true] %s278
          %281 = dma.hbm_to_vmem [thread:$0]  %s1, 128, %s279, [#allocation5]
        $region20: #{epilogue_forward.1} parent=11 // pred_fallthru
          _
        // Predicated region
        $region21: #{epilogue_forward.1} parent=11 // pred_check
          %p282 = pneg %p190
        $region22: #{epilogue_forward.1} parent=11 // pred_check_branch
          %284 = sbr.rel (%p282) target = $region24
        $region23: #{epilogue_forward.1} parent=11 // pred_region
          %s286 = ssub.s32 16, 16
          %287 = vsyncadd [#allocation10], %s286
          %s289 = sshll.u32 [#allocation11], 4
          %s290 = int_to_ptr.vmem [resolvable:$true] %s289
          %292 = dma.hbm_to_vmem [thread:$0]  %s6, 16, %s290, [#allocation10]
        $region24: #{epilogue_forward.1} parent=11 // pred_fallthru
          _
        // Predicated region
        $region25: #{epilogue_forward.1} parent=11 // pred_check
          %p293 = pneg %p211
        $region26: #{epilogue_forward.1} parent=11 // pred_check_branch
          %295 = sbr.rel (%p293) target = $region28
        $region27: #{epilogue_forward.1} parent=11 // pred_region
          %s297 = ssub.s32 256, 256
          %298 = vsyncadd [#allocation13], %s297
          %s299 = sshll.u32 [#allocation12], 4
          %s300 = int_to_ptr.vmem [resolvable:$true] %s299
          %305 = dma.hbm_to_vmem [thread:$0]  %s7, 256, %s300, [#allocation13], 128, 128, 8
        $region28: #{epilogue_forward.1} parent=11 // pred_fallthru
          _
        // Predicated region
        $region29: #{epilogue_forward.1} parent=11 // pred_check
          %p306 = pneg %p232
        $region30: #{epilogue_forward.1} parent=11 // pred_check_branch
          %308 = sbr.rel (%p306) target = $region32
        $region31: #{epilogue_forward.1} parent=11 // pred_region
          %s310 = ssub.s32 16, 16
          %311 = vsyncadd [#allocation13], %s310
          %s313 = sshll.u32 [#allocation14], 4
          %s314 = int_to_ptr.vmem [resolvable:$true] %s313
          %316 = dma.hbm_to_vmem [thread:$0]  %s8, 16, %s314, [#allocation13]
        $region32: #{epilogue_forward.1} parent=11 // pred_fallthru
          _
      $region12: #{epilogue_forward.1} parent=5 // pred_fallthru
        _
      %p317 = scmp.lt.s32.totalorder %s23, 2
      // Predicated region
      $region33: #{epilogue_forward.1} parent=5 // pred_check
        %p318 = pneg %p317
      $region34: #{epilogue_forward.1} parent=5 // pred_check_branch
        %320 = sbr.rel (%p318) target = $region36
      $region35: #{epilogue_forward.1} parent=5 // pred_region
        // Predicated region
        $region37: #{epilogue_forward.1} parent=35 // pred_check
          %p321 = pneg %p85
        $region38: #{epilogue_forward.1} parent=35 // pred_check_branch
          %323 = sbr.rel (%p321) target = $region40
        $region39: #{epilogue_forward.1} parent=35 // pred_region
          %s324 = sand.u32 %s23, 1
          %s325 = scalar_lea.sflag [#allocation7], %s324
          %s326 = sand.u32 %s75, 1
          %s327 = smul.addr %s326, 2048
          %s328 = scalar_lea.vmem [#allocation6], %s327
          %s329 = smul.u32 4, %s23
          %s331 = ssub.s32 32768, 32768
          %332 = vsyncadd %s325, %s331
          %s333 = smul.addr %s329, 64
          %s334 = scalar_lea.hbm %s2, %s333
          %s335 = sshll.u32 %s328, 4
          %s336 = int_to_ptr.vmem [resolvable:$true] %s335
          %341 = dma.hbm_to_vmem [thread:$0]  %s334, 32768, %s336, %s325, 512, 256, 16
        $region40: #{epilogue_forward.1} parent=35 // pred_fallthru
          _
        // Predicated region
        $region41: #{epilogue_forward.1} parent=35 // pred_check
          %p342 = pneg %p111
        $region42: #{epilogue_forward.1} parent=35 // pred_check_branch
          %344 = sbr.rel (%p342) target = $region44
        $region43: #{epilogue_forward.1} parent=35 // pred_region
          %s345 = sand.u32 %s23, 1
          %s346 = scalar_lea.sflag [#allocation7], %s345
          %s347 = sand.u32 %s101, 1
          %s348 = smul.addr %s347, 4
          %s349 = scalar_lea.vmem [#allocation8], %s348
          %s350 = smul.u32 4, %s23
          %s352 = ssub.s32 64, 64
          %353 = vsyncadd %s346, %s352
          %s354 = smul.addr %s350, 16
          %s355 = scalar_lea.hbm %s3, %s354
          %s357 = sshll.u32 %s349, 4
          %s358 = int_to_ptr.vmem [resolvable:$true] %s357
          %360 = dma.hbm_to_vmem [thread:$0]  %s355, 64, %s358, %s346
        $region44: #{epilogue_forward.1} parent=35 // pred_fallthru
          _
        // Predicated region
        $region45: #{epilogue_forward.1} parent=35 // pred_check
          %p361 = pneg %p137
        $region46: #{epilogue_forward.1} parent=35 // pred_check_branch
          %363 = sbr.rel (%p361) target = $region48
        $region47: #{epilogue_forward.1} parent=35 // pred_region
          %s364 = sand.u32 %s23, 1
          %s365 = scalar_lea.sflag [#allocation10], %s364
          %s366 = sand.u32 %s127, 1
          %s367 = smul.addr %s366, 4
          %s368 = scalar_lea.vmem [#allocation9], %s367
          %s369 = smul.u32 4, %s23
          %s371 = ssub.s32 64, 64
          %372 = vsyncadd %s365, %s371
          %s373 = smul.addr %s369, 16
          %s374 = scalar_lea.hbm %s4, %s373
          %s376 = sshll.u32 %s368, 4
          %s377 = int_to_ptr.vmem [resolvable:$true] %s376
          %379 = dma.hbm_to_vmem [thread:$0]  %s374, 64, %s377, %s365
        $region48: #{epilogue_forward.1} parent=35 // pred_fallthru
          _
        // Predicated region
        $region49: #{epilogue_forward.1} parent=35 // pred_check
          %p380 = pneg %p163
        $region50: #{epilogue_forward.1} parent=35 // pred_check_branch
          %382 = sbr.rel (%p380) target = $region52
        $region51: #{epilogue_forward.1} parent=35 // pred_region
          %s383 = smul.u32 64, %s23
          %p384 = scmp.lt.s32.totalorder %s383, 127
          %s385 = scalar_select %p384, %s383, 127
          %s386 = smul.addr %s385, 8
          %s387 = scalar_lea.vmem %s5, %s386
          %s388 = smul.u32 64, %s23
        $region52: #{epilogue_forward.1} parent=35 // pred_fallthru
          _
      $region36: #{epilogue_forward.1} parent=5 // pred_fallthru
        _
      %p389 = scmp.le.s32.totalorder 1, %s23
      %p390 = scmp.lt.s32.totalorder %s23, 3
      %p391 = pnand %p389, %p390
      %p392 = pneg %p391
      // Predicated region
      $region53: #{epilogue_forward.1} parent=5 // pred_check
        _
      $region54: #{epilogue_forward.1} parent=5 // pred_check_branch
        %394 = sbr.rel (%p391) target = $region56
      $region55: #{epilogue_forward.1} parent=5 // pred_region
        %s395 = ssub.s32 %s23, 1
        // Predicated region
        $region57: #{epilogue_forward.1} parent=55 // pred_check
          %p396 = pneg %p65
        $region58: #{epilogue_forward.1} parent=55 // pred_check_branch
          %398 = sbr.rel (%p396) target = $region60
        $region59: #{epilogue_forward.1} parent=55 // pred_region
          %399 = dma.done [#allocation5], 128
        $region60: #{epilogue_forward.1} parent=55 // pred_fallthru
          _
        %s400 = sand.u32 %s28, 1
        %s401 = scalar_lea.sflag [#allocation7], %s400
        %s402 = sand.u32 %s78, 1
        %s403 = smul.addr %s402, 2048
        %s404 = scalar_lea.vmem [#allocation6], %s403
        // Predicated region
        $region61: #{epilogue_forward.1} parent=55 // pred_check
          %p405 = pneg %p91
        $region62: #{epilogue_forward.1} parent=55 // pred_check_branch
          %407 = sbr.rel (%p405) target = $region64
        $region63: #{epilogue_forward.1} parent=55 // pred_region
          %408 = dma.done %s401, 32768
        $region64: #{epilogue_forward.1} parent=55 // pred_fallthru
          _
        %s409 = sand.u32 %s28, 1
        %s410 = scalar_lea.sflag [#allocation7], %s409
        %s411 = sand.u32 %s104, 1
        %s412 = smul.addr %s411, 4
        %s413 = scalar_lea.vmem [#allocation8], %s412
        // Predicated region
        $region65: #{epilogue_forward.1} parent=55 // pred_check
          %p414 = pneg %p117
        $region66: #{epilogue_forward.1} parent=55 // pred_check_branch
          %416 = sbr.rel (%p414) target = $region68
        $region67: #{epilogue_forward.1} parent=55 // pred_region
          %417 = dma.done %s410, 64
        $region68: #{epilogue_forward.1} parent=55 // pred_fallthru
          _
        %s418 = sand.u32 %s28, 1
        %s419 = scalar_lea.sflag [#allocation10], %s418
        %s420 = sand.u32 %s130, 1
        %s421 = smul.addr %s420, 4
        %s422 = scalar_lea.vmem [#allocation9], %s421
        // Predicated region
        $region69: #{epilogue_forward.1} parent=55 // pred_check
          %p423 = pneg %p143
        $region70: #{epilogue_forward.1} parent=55 // pred_check_branch
          %425 = sbr.rel (%p423) target = $region72
        $region71: #{epilogue_forward.1} parent=55 // pred_region
          %426 = dma.done %s419, 64
        $region72: #{epilogue_forward.1} parent=55 // pred_fallthru
          _
        // Predicated region
        $region73: #{epilogue_forward.1} parent=55 // pred_check
          %p427 = pneg %p190
        $region74: #{epilogue_forward.1} parent=55 // pred_check_branch
          %429 = sbr.rel (%p427) target = $region76
        $region75: #{epilogue_forward.1} parent=55 // pred_region
          %430 = dma.done [#allocation10], 16
        $region76: #{epilogue_forward.1} parent=55 // pred_fallthru
          _
        // Predicated region
        $region77: #{epilogue_forward.1} parent=55 // pred_check
          %p431 = pneg %p211
        $region78: #{epilogue_forward.1} parent=55 // pred_check_branch
          %433 = sbr.rel (%p431) target = $region80
        $region79: #{epilogue_forward.1} parent=55 // pred_region
          %434 = dma.done [#allocation13], 256
        $region80: #{epilogue_forward.1} parent=55 // pred_fallthru
          _
        // Predicated region
        $region81: #{epilogue_forward.1} parent=55 // pred_check
          %p435 = pneg %p232
        $region82: #{epilogue_forward.1} parent=55 // pred_check_branch
          %437 = sbr.rel (%p435) target = $region84
        $region83: #{epilogue_forward.1} parent=55 // pred_region
          %438 = dma.done [#allocation13], 16
        $region84: #{epilogue_forward.1} parent=55 // pred_fallthru
          _
        %p439 = pneg %p44
        %p440 = pneg %p41
        %p441 = pneg %p65
        %p442 = pneg %p62
        %s443 = sand.u32 %s28, 1
        %s444 = scalar_lea.sflag [#allocation7], %s443
        %s445 = sand.u32 %s78, 1
        %s446 = smul.addr %s445, 2048
        %s447 = scalar_lea.vmem [#allocation6], %s446
        %p448 = pneg %p91
        %p449 = pneg %p88
        %s450 = sand.u32 %s28, 1
        %s451 = scalar_lea.sflag [#allocation7], %s450
        %s452 = sand.u32 %s104, 1
        %s453 = smul.addr %s452, 4
        %s454 = scalar_lea.vmem [#allocation8], %s453
        %p455 = pneg %p117
        %p456 = pneg %p114
        %s457 = sand.u32 %s28, 1
        %s458 = scalar_lea.sflag [#allocation10], %s457
        %s459 = sand.u32 %s130, 1
        %s460 = smul.addr %s459, 4
        %s461 = scalar_lea.vmem [#allocation9], %s460
        %p462 = pneg %p143
        %p463 = pneg %p140
        %s464 = smul.u32 64, %s28
        %p465 = scmp.lt.s32.totalorder %s464, 127
        %s466 = scalar_select %p465, %s464, 127
        %s467 = smul.addr %s466, 8
        %s468 = scalar_lea.vmem %s5, %s467
        %p469 = pneg %p169
        %p470 = pneg %p166
        %p471 = pneg %p190
        %p472 = pneg %p187
        %p473 = pneg %p211
        %p474 = pneg %p208
        %p475 = pneg %p232
        %p476 = pneg %p229
        %p477 = pneg %p253
        %p478 = pneg %p250
        %s479 = smul.u32 4, %s28
        %s480 = smul.u32 4, %s28
        %s481 = smul.u32 4, %s28
        %s482 = smul.u32 64, %s28
        %p483 = scmp.lt.s32.totalorder %s482, 127
        %s484 = scalar_select %p483, %s482, 127
        %s485 = smul.addr %s484, 8
        %s486 = scalar_lea.vmem %s5, %s485
        %s487 = smul.u32 64, %s28
        %v488 = vld [vmem:[%s0] sm:$0xff]
        %v489 = vld [vmem:[%s0 + $0x8] sm:$0xff]
        %v490 = vld [vmem:[%s0 + $0x10] sm:$0xff]
        %v491 = vld [vmem:[%s0 + $0x18] sm:$0xff]
        %v492 = vld [vmem:[%s0 + $0x20] sm:$0xff]
        %v493 = vld [vmem:[%s0 + $0x28] sm:$0xff]
        %v494 = vld [vmem:[%s0 + $0x30] sm:$0xff]
        %v495 = vld [vmem:[%s0 + $0x38] sm:$0xff]
        %p496 = scmp.eq.s32.totalorder %s28, 0
        // Predicated region
        $region85: #{epilogue_forward.1} parent=55 // pred_check
          %p497 = pneg %p496
        $region86: #{epilogue_forward.1} parent=55 // pred_check_branch
          %499 = sbr.rel (%p497) target = $region88
        $region87: #{epilogue_forward.1} parent=55 // pred_region
          %v500 = vrot.slane %v488, 4
          %v501 = vadd.f32 %v488, %v500
          %v502 = vrot.slane %v501, 2
          %v503 = vadd.f32 %v501, %v502
          %v504 = vrot.slane %v503, 1
          %v505 = vadd.f32 %v503, %v504
          %v506 = vrot.slane %v489, 4
          %v507 = vadd.f32 %v489, %v506
          %v508 = vrot.slane %v507, 2
          %v509 = vadd.f32 %v507, %v508
          %v510 = vrot.slane %v509, 1
          %v511 = vadd.f32 %v509, %v510
          %v512 = vrot.slane %v490, 4
          %v513 = vadd.f32 %v490, %v512
          %v514 = vrot.slane %v513, 2
          %v515 = vadd.f32 %v513, %v514
          %v516 = vrot.slane %v515, 1
          %v517 = vadd.f32 %v515, %v516
          %v518 = vrot.slane %v491, 4
          %v519 = vadd.f32 %v491, %v518
          %v520 = vrot.slane %v519, 2
          %v521 = vadd.f32 %v519, %v520
          %v522 = vrot.slane %v521, 1
          %v523 = vadd.f32 %v521, %v522
          %v524 = vrot.slane %v492, 4
          %v525 = vadd.f32 %v492, %v524
          %v526 = vrot.slane %v525, 2
          %v527 = vadd.f32 %v525, %v526
          %v528 = vrot.slane %v527, 1
          %v529 = vadd.f32 %v527, %v528
          %v530 = vrot.slane %v493, 4
          %v531 = vadd.f32 %v493, %v530
          %v532 = vrot.slane %v531, 2
          %v533 = vadd.f32 %v531, %v532
          %v534 = vrot.slane %v533, 1
          %v535 = vadd.f32 %v533, %v534
          %v536 = vrot.slane %v494, 4
          %v537 = vadd.f32 %v494, %v536
          %v538 = vrot.slane %v537, 2
          %v539 = vadd.f32 %v537, %v538
          %v540 = vrot.slane %v539, 1
          %v541 = vadd.f32 %v539, %v540
          %v542 = vrot.slane %v495, 4
          %v543 = vadd.f32 %v495, %v542
          %v544 = vrot.slane %v543, 2
          %v545 = vadd.f32 %v543, %v544
          %v546 = vrot.slane %v545, 1
          %v547 = vadd.f32 %v545, %v546
          %v548 = vrcp.pop 8.0
          %v549 = vmul.f32 %v505, %v548
          %v550 = vmul.f32 %v511, %v548
          %v551 = vmul.f32 %v517, %v548
          %v552 = vmul.f32 %v523, %v548
          %v553 = vmul.f32 %v529, %v548
          %v554 = vmul.f32 %v535, %v548
          %v555 = vmul.f32 %v541, %v548
          %v556 = vmul.f32 %v547, %v548
          %v557 = vsub.f32 %v488, %v549
          %v558 = vsub.f32 %v489, %v550
          %v559 = vsub.f32 %v490, %v551
          %v560 = vsub.f32 %v491, %v552
          %v561 = vsub.f32 %v492, %v553
          %v562 = vsub.f32 %v493, %v554
          %v563 = vsub.f32 %v494, %v555
          %v564 = vsub.f32 %v495, %v556
          %v565 = vmul.f32 %v557, %v557
          %v566 = vmul.f32 %v558, %v558
          %v567 = vmul.f32 %v559, %v559
          %v568 = vmul.f32 %v560, %v560
          %v569 = vmul.f32 %v561, %v561
          %v570 = vmul.f32 %v562, %v562
          %v571 = vmul.f32 %v563, %v563
          %v572 = vmul.f32 %v564, %v564
          %v573 = vrot.slane %v565, 4
          %v574 = vadd.f32 %v565, %v573
          %v575 = vrot.slane %v574, 2
          %v576 = vadd.f32 %v574, %v575
          %v577 = vrot.slane %v576, 1
          %v578 = vadd.f32 %v576, %v577
          %v579 = vrot.slane %v566, 4
          %v580 = vadd.f32 %v566, %v579
          %v581 = vrot.slane %v580, 2
          %v582 = vadd.f32 %v580, %v581
          %v583 = vrot.slane %v582, 1
          %v584 = vadd.f32 %v582, %v583
          %v585 = vrot.slane %v567, 4
          %v586 = vadd.f32 %v567, %v585
          %v587 = vrot.slane %v586, 2
          %v588 = vadd.f32 %v586, %v587
          %v589 = vrot.slane %v588, 1
          %v590 = vadd.f32 %v588, %v589
          %v591 = vrot.slane %v568, 4
          %v592 = vadd.f32 %v568, %v591
          %v593 = vrot.slane %v592, 2
          %v594 = vadd.f32 %v592, %v593
          %v595 = vrot.slane %v594, 1
          %v596 = vadd.f32 %v594, %v595
          %v597 = vrot.slane %v569, 4
          %v598 = vadd.f32 %v569, %v597
          %v599 = vrot.slane %v598, 2
          %v600 = vadd.f32 %v598, %v599
          %v601 = vrot.slane %v600, 1
          %v602 = vadd.f32 %v600, %v601
          %v603 = vrot.slane %v570, 4
          %v604 = vadd.f32 %v570, %v603
          %v605 = vrot.slane %v604, 2
          %v606 = vadd.f32 %v604, %v605
          %v607 = vrot.slane %v606, 1
          %v608 = vadd.f32 %v606, %v607
          %v609 = vrot.slane %v571, 4
          %v610 = vadd.f32 %v571, %v609
          %v611 = vrot.slane %v610, 2
          %v612 = vadd.f32 %v610, %v611
          %v613 = vrot.slane %v612, 1
          %v614 = vadd.f32 %v612, %v613
          %v615 = vrot.slane %v572, 4
          %v616 = vadd.f32 %v572, %v615
          %v617 = vrot.slane %v616, 2
          %v618 = vadd.f32 %v616, %v617
          %v619 = vrot.slane %v618, 1
          %v620 = vadd.f32 %v618, %v619
          %v621 = vmul.f32 %v578, %v548
          %v622 = vmul.f32 %v584, %v548
          %v623 = vmul.f32 %v590, %v548
          %v624 = vmul.f32 %v596, %v548
          %v625 = vmul.f32 %v602, %v548
          %v626 = vmul.f32 %v608, %v548
          %v627 = vmul.f32 %v614, %v548
          %v628 = vmul.f32 %v620, %v548
          %v629 = vadd.f32 %v621, 1e-08
          %v630 = vadd.f32 %v622, 1e-08
          %v631 = vadd.f32 %v623, 1e-08
          %v632 = vadd.f32 %v624, 1e-08
          %v633 = vadd.f32 %v625, 1e-08
          %v634 = vadd.f32 %v626, 1e-08
          %v635 = vadd.f32 %v627, 1e-08
          %v636 = vadd.f32 %v628, 1e-08
          %v637 = vrsqrt.pop %v629
          %v638 = vmul.f32 %v629, %v637
          %vm639 = vcmp.eq.f32.partialorder %v629, inf
          %v640 = vsel %vm639, %v629, %v638
          %vm641 = vcmp.eq.f32.partialorder %v629, 0.0
          %v642 = vand.u32 %v629, 2147483648
          %v643 = vsel %vm641, %v642, %v640
          %v644 = vrsqrt.pop %v630
          %v645 = vmul.f32 %v630, %v644
          %vm646 = vcmp.eq.f32.partialorder %v630, inf
          %v647 = vsel %vm646, %v630, %v645
          %vm648 = vcmp.eq.f32.partialorder %v630, 0.0
          %v649 = vand.u32 %v630, 2147483648
          %v650 = vsel %vm648, %v649, %v647
          %v651 = vrsqrt.pop %v631
          %v652 = vmul.f32 %v631, %v651
          %vm653 = vcmp.eq.f32.partialorder %v631, inf
          %v654 = vsel %vm653, %v631, %v652
          %vm655 = vcmp.eq.f32.partialorder %v631, 0.0
          %v656 = vand.u32 %v631, 2147483648
          %v657 = vsel %vm655, %v656, %v654
          %v658 = vrsqrt.pop %v632
          %v659 = vmul.f32 %v632, %v658
          %vm660 = vcmp.eq.f32.partialorder %v632, inf
          %v661 = vsel %vm660, %v632, %v659
          %vm662 = vcmp.eq.f32.partialorder %v632, 0.0
          %v663 = vand.u32 %v632, 2147483648
          %v664 = vsel %vm662, %v663, %v661
          %v665 = vrsqrt.pop %v633
          %v666 = vmul.f32 %v633, %v665
          %vm667 = vcmp.eq.f32.partialorder %v633, inf
          %v668 = vsel %vm667, %v633, %v666
          %vm669 = vcmp.eq.f32.partialorder %v633, 0.0
          %v670 = vand.u32 %v633, 2147483648
          %v671 = vsel %vm669, %v670, %v668
          %v672 = vrsqrt.pop %v634
          %v673 = vmul.f32 %v634, %v672
          %vm674 = vcmp.eq.f32.partialorder %v634, inf
          %v675 = vsel %vm674, %v634, %v673
          %vm676 = vcmp.eq.f32.partialorder %v634, 0.0
          %v677 = vand.u32 %v634, 2147483648
          %v678 = vsel %vm676, %v677, %v675
          %v679 = vrsqrt.pop %v635
          %v680 = vmul.f32 %v635, %v679
          %vm681 = vcmp.eq.f32.partialorder %v635, inf
          %v682 = vsel %vm681, %v635, %v680
          %vm683 = vcmp.eq.f32.partialorder %v635, 0.0
          %v684 = vand.u32 %v635, 2147483648
          %v685 = vsel %vm683, %v684, %v682
          %v686 = vrsqrt.pop %v636
          %v687 = vmul.f32 %v636, %v686
          %vm688 = vcmp.eq.f32.partialorder %v636, inf
          %v689 = vsel %vm688, %v636, %v687
          %vm690 = vcmp.eq.f32.partialorder %v636, 0.0
          %v691 = vand.u32 %v636, 2147483648
          %v692 = vsel %vm690, %v691, %v689
          %v693 = vadd.f32 %v643, %v650
          %v694 = vadd.f32 %v693, %v657
          %v695 = vadd.f32 %v694, %v664
          %v696 = vadd.f32 %v695, %v671
          %v697 = vadd.f32 %v696, %v678
          %v698 = vadd.f32 %v697, %v685
          %v699 = vadd.f32 %v698, %v692
          %700 = vadd.xlane.f32.xlu0 %v699
          %v701 = vpop.xlane.xlu0 %700
          %v702 = vrcp.pop 1024.0
          %v703 = vmul.f32 %v701, %v702
          %vm704 = vcmask 0
          %705 = vst.msk [vmem:[#allocation3] sm:$0x1] %vm704, %v703
          %vm706 = vcmask 130048
          %707 = vst.msk [vmem:[#allocation2] sm:$0xff] %vm706, 0.0
        $region88: #{epilogue_forward.1} parent=55 // pred_fallthru
          _
        %v708 = vld [vmem:[#allocation3] sm:$0x1]
        %v709 = vpack.c.bf16 %v488, %v488
        %v710 = vpack.c.bf16 %v489, %v489
        %v711 = vpack.c.bf16 %v490, %v490
        %v712 = vpack.c.bf16 %v491, %v491
        %v713 = vpack.c.bf16 %v492, %v492
        %v714 = vpack.c.bf16 %v493, %v493
        %v715 = vpack.c.bf16 %v494, %v494
        %v716 = vpack.c.bf16 %v495, %v495
        %v717 = vld [vmem:[%s404] sm:$0xff]
        %v718 = vld [vmem:[%s404 + $0x8] sm:$0xff]
        %v719 = vld [vmem:[%s404 + $0x10] sm:$0xff]
        %v720 = vld [vmem:[%s404 + $0x18] sm:$0xff]
        %v721 = vld [vmem:[%s404 + $0x20] sm:$0xff]
        %v722 = vld [vmem:[%s404 + $0x28] sm:$0xff]
        %v723 = vld [vmem:[%s404 + $0x30] sm:$0xff]
        %v724 = vld [vmem:[%s404 + $0x38] sm:$0xff]
        %v725 = vld [vmem:[%s404 + $0x40] sm:$0xff]
        %v726 = vld [vmem:[%s404 + $0x48] sm:$0xff]
        %v727 = vld [vmem:[%s404 + $0x50] sm:$0xff]
        %v728 = vld [vmem:[%s404 + $0x58] sm:$0xff]
        %v729 = vld [vmem:[%s404 + $0x60] sm:$0xff]
        %v730 = vld [vmem:[%s404 + $0x68] sm:$0xff]
        %v731 = vld [vmem:[%s404 + $0x70] sm:$0xff]
        %v732 = vld [vmem:[%s404 + $0x78] sm:$0xff]
        %v733 = vld [vmem:[%s404 + $0x80] sm:$0xff]
        %v734 = vld [vmem:[%s404 + $0x88] sm:$0xff]
        %v735 = vld [vmem:[%s404 + $0x90] sm:$0xff]
        %v736 = vld [vmem:[%s404 + $0x98] sm:$0xff]
        %v737 = vld [vmem:[%s404 + $0xa0] sm:$0xff]
        %v738 = vld [vmem:[%s404 + $0xa8] sm:$0xff]
        %v739 = vld [vmem:[%s404 + $0xb0] sm:$0xff]
        %v740 = vld [vmem:[%s404 + $0xb8] sm:$0xff]
        %v741 = vld [vmem:[%s404 + $0xc0] sm:$0xff]
        %v742 = vld [vmem:[%s404 + $0xc8] sm:$0xff]
        %v743 = vld [vmem:[%s404 + $0xd0] sm:$0xff]
        %v744 = vld [vmem:[%s404 + $0xd8] sm:$0xff]
        %v745 = vld [vmem:[%s404 + $0xe0] sm:$0xff]
        %v746 = vld [vmem:[%s404 + $0xe8] sm:$0xff]
        %v747 = vld [vmem:[%s404 + $0xf0] sm:$0xff]
        %v748 = vld [vmem:[%s404 + $0xf8] sm:$0xff]
        %v749 = vld [vmem:[%s404 + $0x100] sm:$0xff]
        %v750 = vld [vmem:[%s404 + $0x108] sm:$0xff]
        %v751 = vld [vmem:[%s404 + $0x110] sm:$0xff]
        %v752 = vld [vmem:[%s404 + $0x118] sm:$0xff]
        %v753 = vld [vmem:[%s404 + $0x120] sm:$0xff]
        %v754 = vld [vmem:[%s404 + $0x128] sm:$0xff]
        %v755 = vld [vmem:[%s404 + $0x130] sm:$0xff]
        %v756 = vld [vmem:[%s404 + $0x138] sm:$0xff]
        %v757 = vld [vmem:[%s404 + $0x140] sm:$0xff]
        %v758 = vld [vmem:[%s404 + $0x148] sm:$0xff]
        %v759 = vld [vmem:[%s404 + $0x150] sm:$0xff]
        %v760 = vld [vmem:[%s404 + $0x158] sm:$0xff]
        %v761 = vld [vmem:[%s404 + $0x160] sm:$0xff]
        %v762 = vld [vmem:[%s404 + $0x168] sm:$0xff]
        %v763 = vld [vmem:[%s404 + $0x170] sm:$0xff]
        %v764 = vld [vmem:[%s404 + $0x178] sm:$0xff]
        %v765 = vld [vmem:[%s404 + $0x180] sm:$0xff]
        %v766 = vld [vmem:[%s404 + $0x188] sm:$0xff]
        %v767 = vld [vmem:[%s404 + $0x190] sm:$0xff]
        %v768 = vld [vmem:[%s404 + $0x198] sm:$0xff]
        %v769 = vld [vmem:[%s404 + $0x1a0] sm:$0xff]
        %v770 = vld [vmem:[%s404 + $0x1a8] sm:$0xff]
        %v771 = vld [vmem:[%s404 + $0x1b0] sm:$0xff]
        %v772 = vld [vmem:[%s404 + $0x1b8] sm:$0xff]
        %v773 = vld [vmem:[%s404 + $0x1c0] sm:$0xff]
        %v774 = vld [vmem:[%s404 + $0x1c8] sm:$0xff]
        %v775 = vld [vmem:[%s404 + $0x1d0] sm:$0xff]
        %v776 = vld [vmem:[%s404 + $0x1d8] sm:$0xff]
        %v777 = vld [vmem:[%s404 + $0x1e0] sm:$0xff]
        %v778 = vld [vmem:[%s404 + $0x1e8] sm:$0xff]
        %v779 = vld [vmem:[%s404 + $0x1f0] sm:$0xff]
        %v780 = vld [vmem:[%s404 + $0x1f8] sm:$0xff]
        %v781 = vld [vmem:[%s404 + $0x200] sm:$0xff]
        %v782 = vld [vmem:[%s404 + $0x208] sm:$0xff]
        %v783 = vld [vmem:[%s404 + $0x210] sm:$0xff]
        %v784 = vld [vmem:[%s404 + $0x218] sm:$0xff]
        %v785 = vld [vmem:[%s404 + $0x220] sm:$0xff]
        %v786 = vld [vmem:[%s404 + $0x228] sm:$0xff]
        %v787 = vld [vmem:[%s404 + $0x230] sm:$0xff]
        %v788 = vld [vmem:[%s404 + $0x238] sm:$0xff]
        %v789 = vld [vmem:[%s404 + $0x240] sm:$0xff]
        %v790 = vld [vmem:[%s404 + $0x248] sm:$0xff]
        %v791 = vld [vmem:[%s404 + $0x250] sm:$0xff]
        %v792 = vld [vmem:[%s404 + $0x258] sm:$0xff]
        %v793 = vld [vmem:[%s404 + $0x260] sm:$0xff]
        %v794 = vld [vmem:[%s404 + $0x268] sm:$0xff]
        %v795 = vld [vmem:[%s404 + $0x270] sm:$0xff]
        %v796 = vld [vmem:[%s404 + $0x278] sm:$0xff]
        %v797 = vld [vmem:[%s404 + $0x280] sm:$0xff]
        %v798 = vld [vmem:[%s404 + $0x288] sm:$0xff]
        %v799 = vld [vmem:[%s404 + $0x290] sm:$0xff]
        %v800 = vld [vmem:[%s404 + $0x298] sm:$0xff]
        %v801 = vld [vmem:[%s404 + $0x2a0] sm:$0xff]
        %v802 = vld [vmem:[%s404 + $0x2a8] sm:$0xff]
        %v803 = vld [vmem:[%s404 + $0x2b0] sm:$0xff]
        %v804 = vld [vmem:[%s404 + $0x2b8] sm:$0xff]
        %v805 = vld [vmem:[%s404 + $0x2c0] sm:$0xff]
        %v806 = vld [vmem:[%s404 + $0x2c8] sm:$0xff]
        %v807 = vld [vmem:[%s404 + $0x2d0] sm:$0xff]
        %v808 = vld [vmem:[%s404 + $0x2d8] sm:$0xff]
        %v809 = vld [vmem:[%s404 + $0x2e0] sm:$0xff]
        %v810 = vld [vmem:[%s404 + $0x2e8] sm:$0xff]
        %v811 = vld [vmem:[%s404 + $0x2f0] sm:$0xff]
        %v812 = vld [vmem:[%s404 + $0x2f8] sm:$0xff]
        %v813 = vld [vmem:[%s404 + $0x300] sm:$0xff]
        %v814 = vld [vmem:[%s404 + $0x308] sm:$0xff]
        %v815 = vld [vmem:[%s404 + $0x310] sm:$0xff]
        %v816 = vld [vmem:[%s404 + $0x318] sm:$0xff]
        %v817 = vld [vmem:[%s404 + $0x320] sm:$0xff]
        %v818 = vld [vmem:[%s404 + $0x328] sm:$0xff]
        %v819 = vld [vmem:[%s404 + $0x330] sm:$0xff]
        %v820 = vld [vmem:[%s404 + $0x338] sm:$0xff]
        %v821 = vld [vmem:[%s404 + $0x340] sm:$0xff]
        %v822 = vld [vmem:[%s404 + $0x348] sm:$0xff]
        %v823 = vld [vmem:[%s404 + $0x350] sm:$0xff]
        %v824 = vld [vmem:[%s404 + $0x358] sm:$0xff]
        %v825 = vld [vmem:[%s404 + $0x360] sm:$0xff]
        %v826 = vld [vmem:[%s404 + $0x368] sm:$0xff]
        %v827 = vld [vmem:[%s404 + $0x370] sm:$0xff]
        %v828 = vld [vmem:[%s404 + $0x378] sm:$0xff]
        %v829 = vld [vmem:[%s404 + $0x380] sm:$0xff]
        %v830 = vld [vmem:[%s404 + $0x388] sm:$0xff]
        %v831 = vld [vmem:[%s404 + $0x390] sm:$0xff]
        %v832 = vld [vmem:[%s404 + $0x398] sm:$0xff]
        %v833 = vld [vmem:[%s404 + $0x3a0] sm:$0xff]
        %v834 = vld [vmem:[%s404 + $0x3a8] sm:$0xff]
        %v835 = vld [vmem:[%s404 + $0x3b0] sm:$0xff]
        %v836 = vld [vmem:[%s404 + $0x3b8] sm:$0xff]
        %v837 = vld [vmem:[%s404 + $0x3c0] sm:$0xff]
        %v838 = vld [vmem:[%s404 + $0x3c8] sm:$0xff]
        %v839 = vld [vmem:[%s404 + $0x3d0] sm:$0xff]
        %v840 = vld [vmem:[%s404 + $0x3d8] sm:$0xff]
        %v841 = vld [vmem:[%s404 + $0x3e0] sm:$0xff]
        %v842 = vld [vmem:[%s404 + $0x3e8] sm:$0xff]
        %v843 = vld [vmem:[%s404 + $0x3f0] sm:$0xff]
        %v844 = vld [vmem:[%s404 + $0x3f8] sm:$0xff]
        %v845 = vld [vmem:[%s404 + $0x400] sm:$0xff]
        %v846 = vld [vmem:[%s404 + $0x408] sm:$0xff]
        %v847 = vld [vmem:[%s404 + $0x410] sm:$0xff]
        %v848 = vld [vmem:[%s404 + $0x418] sm:$0xff]
        %v849 = vld [vmem:[%s404 + $0x420] sm:$0xff]
        %v850 = vld [vmem:[%s404 + $0x428] sm:$0xff]
        %v851 = vld [vmem:[%s404 + $0x430] sm:$0xff]
        %v852 = vld [vmem:[%s404 + $0x438] sm:$0xff]
        %v853 = vld [vmem:[%s404 + $0x440] sm:$0xff]
        %v854 = vld [vmem:[%s404 + $0x448] sm:$0xff]
        %v855 = vld [vmem:[%s404 + $0x450] sm:$0xff]
        %v856 = vld [vmem:[%s404 + $0x458] sm:$0xff]
        %v857 = vld [vmem:[%s404 + $0x460] sm:$0xff]
        %v858 = vld [vmem:[%s404 + $0x468] sm:$0xff]
        %v859 = vld [vmem:[%s404 + $0x470] sm:$0xff]
        %v860 = vld [vmem:[%s404 + $0x478] sm:$0xff]
        %v861 = vld [vmem:[%s404 + $0x480] sm:$0xff]
        %v862 = vld [vmem:[%s404 + $0x488] sm:$0xff]
        %v863 = vld [vmem:[%s404 + $0x490] sm:$0xff]
        %v864 = vld [vmem:[%s404 + $0x498] sm:$0xff]
        %v865 = vld [vmem:[%s404 + $0x4a0] sm:$0xff]
        %v866 = vld [vmem:[%s404 + $0x4a8] sm:$0xff]
        %v867 = vld [vmem:[%s404 + $0x4b0] sm:$0xff]
        %v868 = vld [vmem:[%s404 + $0x4b8] sm:$0xff]
        %v869 = vld [vmem:[%s404 + $0x4c0] sm:$0xff]
        %v870 = vld [vmem:[%s404 + $0x4c8] sm:$0xff]
        %v871 = vld [vmem:[%s404 + $0x4d0] sm:$0xff]
        %v872 = vld [vmem:[%s404 + $0x4d8] sm:$0xff]
        %v873 = vld [vmem:[%s404 + $0x4e0] sm:$0xff]
        %v874 = vld [vmem:[%s404 + $0x4e8] sm:$0xff]
        %v875 = vld [vmem:[%s404 + $0x4f0] sm:$0xff]
        %v876 = vld [vmem:[%s404 + $0x4f8] sm:$0xff]
        %v877 = vld [vmem:[%s404 + $0x500] sm:$0xff]
        %v878 = vld [vmem:[%s404 + $0x508] sm:$0xff]
        %v879 = vld [vmem:[%s404 + $0x510] sm:$0xff]
        %v880 = vld [vmem:[%s404 + $0x518] sm:$0xff]
        %v881 = vld [vmem:[%s404 + $0x520] sm:$0xff]
        %v882 = vld [vmem:[%s404 + $0x528] sm:$0xff]
        %v883 = vld [vmem:[%s404 + $0x530] sm:$0xff]
        %v884 = vld [vmem:[%s404 + $0x538] sm:$0xff]
        %v885 = vld [vmem:[%s404 + $0x540] sm:$0xff]
        %v886 = vld [vmem:[%s404 + $0x548] sm:$0xff]
        %v887 = vld [vmem:[%s404 + $0x550] sm:$0xff]
        %v888 = vld [vmem:[%s404 + $0x558] sm:$0xff]
        %v889 = vld [vmem:[%s404 + $0x560] sm:$0xff]
        %v890 = vld [vmem:[%s404 + $0x568] sm:$0xff]
        %v891 = vld [vmem:[%s404 + $0x570] sm:$0xff]
        %v892 = vld [vmem:[%s404 + $0x578] sm:$0xff]
        %v893 = vld [vmem:[%s404 + $0x580] sm:$0xff]
        %v894 = vld [vmem:[%s404 + $0x588] sm:$0xff]
        %v895 = vld [vmem:[%s404 + $0x590] sm:$0xff]
        %v896 = vld [vmem:[%s404 + $0x598] sm:$0xff]
        %v897 = vld [vmem:[%s404 + $0x5a0] sm:$0xff]
        %v898 = vld [vmem:[%s404 + $0x5a8] sm:$0xff]
        %v899 = vld [vmem:[%s404 + $0x5b0] sm:$0xff]
        %v900 = vld [vmem:[%s404 + $0x5b8] sm:$0xff]
        %v901 = vld [vmem:[%s404 + $0x5c0] sm:$0xff]
        %v902 = vld [vmem:[%s404 + $0x5c8] sm:$0xff]
        %v903 = vld [vmem:[%s404 + $0x5d0] sm:$0xff]
        %v904 = vld [vmem:[%s404 + $0x5d8] sm:$0xff]
        %v905 = vld [vmem:[%s404 + $0x5e0] sm:$0xff]
        %v906 = vld [vmem:[%s404 + $0x5e8] sm:$0xff]
        %v907 = vld [vmem:[%s404 + $0x5f0] sm:$0xff]
        %v908 = vld [vmem:[%s404 + $0x5f8] sm:$0xff]
        %v909 = vld [vmem:[%s404 + $0x600] sm:$0xff]
        %v910 = vld [vmem:[%s404 + $0x608] sm:$0xff]
        %v911 = vld [vmem:[%s404 + $0x610] sm:$0xff]
        %v912 = vld [vmem:[%s404 + $0x618] sm:$0xff]
        %v913 = vld [vmem:[%s404 + $0x620] sm:$0xff]
        %v914 = vld [vmem:[%s404 + $0x628] sm:$0xff]
        %v915 = vld [vmem:[%s404 + $0x630] sm:$0xff]
        %v916 = vld [vmem:[%s404 + $0x638] sm:$0xff]
        %v917 = vld [vmem:[%s404 + $0x640] sm:$0xff]
        %v918 = vld [vmem:[%s404 + $0x648] sm:$0xff]
        %v919 = vld [vmem:[%s404 + $0x650] sm:$0xff]
        %v920 = vld [vmem:[%s404 + $0x658] sm:$0xff]
        %v921 = vld [vmem:[%s404 + $0x660] sm:$0xff]
        %v922 = vld [vmem:[%s404 + $0x668] sm:$0xff]
        %v923 = vld [vmem:[%s404 + $0x670] sm:$0xff]
        %v924 = vld [vmem:[%s404 + $0x678] sm:$0xff]
        %v925 = vld [vmem:[%s404 + $0x680] sm:$0xff]
        %v926 = vld [vmem:[%s404 + $0x688] sm:$0xff]
        %v927 = vld [vmem:[%s404 + $0x690] sm:$0xff]
        %v928 = vld [vmem:[%s404 + $0x698] sm:$0xff]
        %v929 = vld [vmem:[%s404 + $0x6a0] sm:$0xff]
        %v930 = vld [vmem:[%s404 + $0x6a8] sm:$0xff]
        %v931 = vld [vmem:[%s404 + $0x6b0] sm:$0xff]
        %v932 = vld [vmem:[%s404 + $0x6b8] sm:$0xff]
        %v933 = vld [vmem:[%s404 + $0x6c0] sm:$0xff]
        %v934 = vld [vmem:[%s404 + $0x6c8] sm:$0xff]
        %v935 = vld [vmem:[%s404 + $0x6d0] sm:$0xff]
        %v936 = vld [vmem:[%s404 + $0x6d8] sm:$0xff]
        %v937 = vld [vmem:[%s404 + $0x6e0] sm:$0xff]
        %v938 = vld [vmem:[%s404 + $0x6e8] sm:$0xff]
        %v939 = vld [vmem:[%s404 + $0x6f0] sm:$0xff]
        %v940 = vld [vmem:[%s404 + $0x6f8] sm:$0xff]
        %v941 = vld [vmem:[%s404 + $0x700] sm:$0xff]
        %v942 = vld [vmem:[%s404 + $0x708] sm:$0xff]
        %v943 = vld [vmem:[%s404 + $0x710] sm:$0xff]
        %v944 = vld [vmem:[%s404 + $0x718] sm:$0xff]
        %v945 = vld [vmem:[%s404 + $0x720] sm:$0xff]
        %v946 = vld [vmem:[%s404 + $0x728] sm:$0xff]
        %v947 = vld [vmem:[%s404 + $0x730] sm:$0xff]
        %v948 = vld [vmem:[%s404 + $0x738] sm:$0xff]
        %v949 = vld [vmem:[%s404 + $0x740] sm:$0xff]
        %v950 = vld [vmem:[%s404 + $0x748] sm:$0xff]
        %v951 = vld [vmem:[%s404 + $0x750] sm:$0xff]
        %v952 = vld [vmem:[%s404 + $0x758] sm:$0xff]
        %v953 = vld [vmem:[%s404 + $0x760] sm:$0xff]
        %v954 = vld [vmem:[%s404 + $0x768] sm:$0xff]
        %v955 = vld [vmem:[%s404 + $0x770] sm:$0xff]
        %v956 = vld [vmem:[%s404 + $0x778] sm:$0xff]
        %v957 = vld [vmem:[%s404 + $0x780] sm:$0xff]
        %v958 = vld [vmem:[%s404 + $0x788] sm:$0xff]
        %v959 = vld [vmem:[%s404 + $0x790] sm:$0xff]
        %v960 = vld [vmem:[%s404 + $0x798] sm:$0xff]
        %v961 = vld [vmem:[%s404 + $0x7a0] sm:$0xff]
        %v962 = vld [vmem:[%s404 + $0x7a8] sm:$0xff]
        %v963 = vld [vmem:[%s404 + $0x7b0] sm:$0xff]
        %v964 = vld [vmem:[%s404 + $0x7b8] sm:$0xff]
        %v965 = vld [vmem:[%s404 + $0x7c0] sm:$0xff]
        %v966 = vld [vmem:[%s404 + $0x7c8] sm:$0xff]
        %v967 = vld [vmem:[%s404 + $0x7d0] sm:$0xff]
        %v968 = vld [vmem:[%s404 + $0x7d8] sm:$0xff]
        %v969 = vld [vmem:[%s404 + $0x7e0] sm:$0xff]
        %v970 = vld [vmem:[%s404 + $0x7e8] sm:$0xff]
        %v971 = vld [vmem:[%s404 + $0x7f0] sm:$0xff]
        %v972 = vld [vmem:[%s404 + $0x7f8] sm:$0xff]
        %v973 = vld [vmem:[%s413] sm:$0xf]
        %v975 = vlaneseq
        %v976 = vshrl.u32 %v975, 7
        %v977 = vsub.s32 0, %v976
        %v978 = vrot.slane %v973, %v977
        %v979 = vlaneseq
        %v980 = vshrl.u32 %v979, 7
        %v981 = vsub.s32 1, %v980
        %v982 = vrot.slane %v973, %v981
        %v983 = vlaneseq
        %v984 = vshrl.u32 %v983, 7
        %v985 = vsub.s32 2, %v984
        %v986 = vrot.slane %v973, %v985
        %v987 = vlaneseq
        %v988 = vshrl.u32 %v987, 7
        %v989 = vsub.s32 3, %v988
        %v990 = vrot.slane %v973, %v989
        %v1251 = vunpack.c.l.b16 %v717
        %v1252 = vunpack.c.h.b16 %v717
        %v1253 = vunpack.c.l.b16 %v718
        %v1254 = vunpack.c.h.b16 %v718
        %v1255 = vunpack.c.l.b16 %v719
        %v1256 = vunpack.c.h.b16 %v719
        %v1257 = vunpack.c.l.b16 %v720
        %v1258 = vunpack.c.h.b16 %v720
        %v1259 = vunpack.c.l.b16 %v721
        %v1260 = vunpack.c.h.b16 %v721
        %v1261 = vunpack.c.l.b16 %v722
        %v1262 = vunpack.c.h.b16 %v722
        %v1263 = vunpack.c.l.b16 %v723
        %v1264 = vunpack.c.h.b16 %v723
        %v1265 = vunpack.c.l.b16 %v724
        %v1266 = vunpack.c.h.b16 %v724
        %v1267 = vunpack.c.l.b16 %v725
        %v1268 = vunpack.c.h.b16 %v725
        %v1269 = vunpack.c.l.b16 %v726
        %v1270 = vunpack.c.h.b16 %v726
        %v1271 = vunpack.c.l.b16 %v727
        %v1272 = vunpack.c.h.b16 %v727
        %v1273 = vunpack.c.l.b16 %v728
        %v1274 = vunpack.c.h.b16 %v728
        %v1275 = vunpack.c.l.b16 %v729
        %v1276 = vunpack.c.h.b16 %v729
        %v1277 = vunpack.c.l.b16 %v730
        %v1278 = vunpack.c.h.b16 %v730
        %v1279 = vunpack.c.l.b16 %v731
        %v1280 = vunpack.c.h.b16 %v731
        %v1281 = vunpack.c.l.b16 %v732
        %v1282 = vunpack.c.h.b16 %v732
        %v1283 = vunpack.c.l.b16 %v733
        %v1284 = vunpack.c.h.b16 %v733
        %v1285 = vunpack.c.l.b16 %v734
        %v1286 = vunpack.c.h.b16 %v734
        %v1287 = vunpack.c.l.b16 %v735
        %v1288 = vunpack.c.h.b16 %v735
        %v1289 = vunpack.c.l.b16 %v736
        %v1290 = vunpack.c.h.b16 %v736
        %v1291 = vunpack.c.l.b16 %v737
        %v1292 = vunpack.c.h.b16 %v737
        %v1293 = vunpack.c.l.b16 %v738
        %v1294 = vunpack.c.h.b16 %v738
        %v1295 = vunpack.c.l.b16 %v739
        %v1296 = vunpack.c.h.b16 %v739
        %v1297 = vunpack.c.l.b16 %v740
        %v1298 = vunpack.c.h.b16 %v740
        %v1299 = vunpack.c.l.b16 %v741
        %v1300 = vunpack.c.h.b16 %v741
        %v1301 = vunpack.c.l.b16 %v742
        %v1302 = vunpack.c.h.b16 %v742
        %v1303 = vunpack.c.l.b16 %v743
        %v1304 = vunpack.c.h.b16 %v743
        %v1305 = vunpack.c.l.b16 %v744
        %v1306 = vunpack.c.h.b16 %v744
        %v1307 = vunpack.c.l.b16 %v745
        %v1308 = vunpack.c.h.b16 %v745
        %v1309 = vunpack.c.l.b16 %v746
        %v1310 = vunpack.c.h.b16 %v746
        %v1311 = vunpack.c.l.b16 %v747
        %v1312 = vunpack.c.h.b16 %v747
        %v1313 = vunpack.c.l.b16 %v748
        %v1314 = vunpack.c.h.b16 %v748
        %v1315 = vunpack.c.l.b16 %v749
        %v1316 = vunpack.c.h.b16 %v749
        %v1317 = vunpack.c.l.b16 %v750
        %v1318 = vunpack.c.h.b16 %v750
        %v1319 = vunpack.c.l.b16 %v751
        %v1320 = vunpack.c.h.b16 %v751
        %v1321 = vunpack.c.l.b16 %v752
        %v1322 = vunpack.c.h.b16 %v752
        %v1323 = vunpack.c.l.b16 %v753
        %v1324 = vunpack.c.h.b16 %v753
        %v1325 = vunpack.c.l.b16 %v754
        %v1326 = vunpack.c.h.b16 %v754
        %v1327 = vunpack.c.l.b16 %v755
        %v1328 = vunpack.c.h.b16 %v755
        %v1329 = vunpack.c.l.b16 %v756
        %v1330 = vunpack.c.h.b16 %v756
        %v1331 = vunpack.c.l.b16 %v757
        %v1332 = vunpack.c.h.b16 %v757
        %v1333 = vunpack.c.l.b16 %v758
        %v1334 = vunpack.c.h.b16 %v758
        %v1335 = vunpack.c.l.b16 %v759
        %v1336 = vunpack.c.h.b16 %v759
        %v1337 = vunpack.c.l.b16 %v760
        %v1338 = vunpack.c.h.b16 %v760
        %v1339 = vunpack.c.l.b16 %v761
        %v1340 = vunpack.c.h.b16 %v761
        %v1341 = vunpack.c.l.b16 %v762
        %v1342 = vunpack.c.h.b16 %v762
        %v1343 = vunpack.c.l.b16 %v763
        %v1344 = vunpack.c.h.b16 %v763
        %v1345 = vunpack.c.l.b16 %v764
        %v1346 = vunpack.c.h.b16 %v764
        %v1347 = vunpack.c.l.b16 %v765
        %v1348 = vunpack.c.h.b16 %v765
        %v1349 = vunpack.c.l.b16 %v766
        %v1350 = vunpack.c.h.b16 %v766
        %v1351 = vunpack.c.l.b16 %v767
        %v1352 = vunpack.c.h.b16 %v767
        %v1353 = vunpack.c.l.b16 %v768
        %v1354 = vunpack.c.h.b16 %v768
        %v1355 = vunpack.c.l.b16 %v769
        %v1356 = vunpack.c.h.b16 %v769
        %v1357 = vunpack.c.l.b16 %v770
        %v1358 = vunpack.c.h.b16 %v770
        %v1359 = vunpack.c.l.b16 %v771
        %v1360 = vunpack.c.h.b16 %v771
        %v1361 = vunpack.c.l.b16 %v772
        %v1362 = vunpack.c.h.b16 %v772
        %v1363 = vunpack.c.l.b16 %v773
        %v1364 = vunpack.c.h.b16 %v773
        %v1365 = vunpack.c.l.b16 %v774
        %v1366 = vunpack.c.h.b16 %v774
        %v1367 = vunpack.c.l.b16 %v775
        %v1368 = vunpack.c.h.b16 %v775
        %v1369 = vunpack.c.l.b16 %v776
        %v1370 = vunpack.c.h.b16 %v776
        %v1371 = vunpack.c.l.b16 %v777
        %v1372 = vunpack.c.h.b16 %v777
        %v1373 = vunpack.c.l.b16 %v778
        %v1374 = vunpack.c.h.b16 %v778
        %v1375 = vunpack.c.l.b16 %v779
        %v1376 = vunpack.c.h.b16 %v779
        %v1377 = vunpack.c.l.b16 %v780
        %v1378 = vunpack.c.h.b16 %v780
        %v1379 = vunpack.c.l.b16 %v781
        %v1380 = vunpack.c.h.b16 %v781
        %v1381 = vunpack.c.l.b16 %v782
        %v1382 = vunpack.c.h.b16 %v782
        %v1383 = vunpack.c.l.b16 %v783
        %v1384 = vunpack.c.h.b16 %v783
        %v1385 = vunpack.c.l.b16 %v784
        %v1386 = vunpack.c.h.b16 %v784
        %v1387 = vunpack.c.l.b16 %v785
        %v1388 = vunpack.c.h.b16 %v785
        %v1389 = vunpack.c.l.b16 %v786
        %v1390 = vunpack.c.h.b16 %v786
        %v1391 = vunpack.c.l.b16 %v787
        %v1392 = vunpack.c.h.b16 %v787
        %v1393 = vunpack.c.l.b16 %v788
        %v1394 = vunpack.c.h.b16 %v788
        %v1395 = vunpack.c.l.b16 %v789
        %v1396 = vunpack.c.h.b16 %v789
        %v1397 = vunpack.c.l.b16 %v790
        %v1398 = vunpack.c.h.b16 %v790
        %v1399 = vunpack.c.l.b16 %v791
        %v1400 = vunpack.c.h.b16 %v791
        %v1401 = vunpack.c.l.b16 %v792
        %v1402 = vunpack.c.h.b16 %v792
        %v1403 = vunpack.c.l.b16 %v793
        %v1404 = vunpack.c.h.b16 %v793
        %v1405 = vunpack.c.l.b16 %v794
        %v1406 = vunpack.c.h.b16 %v794
        %v1407 = vunpack.c.l.b16 %v795
        %v1408 = vunpack.c.h.b16 %v795
        %v1409 = vunpack.c.l.b16 %v796
        %v1410 = vunpack.c.h.b16 %v796
        %v1411 = vunpack.c.l.b16 %v797
        %v1412 = vunpack.c.h.b16 %v797
        %v1413 = vunpack.c.l.b16 %v798
        %v1414 = vunpack.c.h.b16 %v798
        %v1415 = vunpack.c.l.b16 %v799
        %v1416 = vunpack.c.h.b16 %v799
        %v1417 = vunpack.c.l.b16 %v800
        %v1418 = vunpack.c.h.b16 %v800
        %v1419 = vunpack.c.l.b16 %v801
        %v1420 = vunpack.c.h.b16 %v801
        %v1421 = vunpack.c.l.b16 %v802
        %v1422 = vunpack.c.h.b16 %v802
        %v1423 = vunpack.c.l.b16 %v803
        %v1424 = vunpack.c.h.b16 %v803
        %v1425 = vunpack.c.l.b16 %v804
        %v1426 = vunpack.c.h.b16 %v804
        %v1427 = vunpack.c.l.b16 %v805
        %v1428 = vunpack.c.h.b16 %v805
        %v1429 = vunpack.c.l.b16 %v806
        %v1430 = vunpack.c.h.b16 %v806
        %v1431 = vunpack.c.l.b16 %v807
        %v1432 = vunpack.c.h.b16 %v807
        %v1433 = vunpack.c.l.b16 %v808
        %v1434 = vunpack.c.h.b16 %v808
        %v1435 = vunpack.c.l.b16 %v809
        %v1436 = vunpack.c.h.b16 %v809
        %v1437 = vunpack.c.l.b16 %v810
        %v1438 = vunpack.c.h.b16 %v810
        %v1439 = vunpack.c.l.b16 %v811
        %v1440 = vunpack.c.h.b16 %v811
        %v1441 = vunpack.c.l.b16 %v812
        %v1442 = vunpack.c.h.b16 %v812
        %v1443 = vunpack.c.l.b16 %v813
        %v1444 = vunpack.c.h.b16 %v813
        %v1445 = vunpack.c.l.b16 %v814
        %v1446 = vunpack.c.h.b16 %v814
        %v1447 = vunpack.c.l.b16 %v815
        %v1448 = vunpack.c.h.b16 %v815
        %v1449 = vunpack.c.l.b16 %v816
        %v1450 = vunpack.c.h.b16 %v816
        %v1451 = vunpack.c.l.b16 %v817
        %v1452 = vunpack.c.h.b16 %v817
        %v1453 = vunpack.c.l.b16 %v818
        %v1454 = vunpack.c.h.b16 %v818
        %v1455 = vunpack.c.l.b16 %v819
        %v1456 = vunpack.c.h.b16 %v819
        %v1457 = vunpack.c.l.b16 %v820
        %v1458 = vunpack.c.h.b16 %v820
        %v1459 = vunpack.c.l.b16 %v821
        %v1460 = vunpack.c.h.b16 %v821
        %v1461 = vunpack.c.l.b16 %v822
        %v1462 = vunpack.c.h.b16 %v822
        %v1463 = vunpack.c.l.b16 %v823
        %v1464 = vunpack.c.h.b16 %v823
        %v1465 = vunpack.c.l.b16 %v824
        %v1466 = vunpack.c.h.b16 %v824
        %v1467 = vunpack.c.l.b16 %v825
        %v1468 = vunpack.c.h.b16 %v825
        %v1469 = vunpack.c.l.b16 %v826
        %v1470 = vunpack.c.h.b16 %v826
        %v1471 = vunpack.c.l.b16 %v827
        %v1472 = vunpack.c.h.b16 %v827
        %v1473 = vunpack.c.l.b16 %v828
        %v1474 = vunpack.c.h.b16 %v828
        %v1475 = vunpack.c.l.b16 %v829
        %v1476 = vunpack.c.h.b16 %v829
        %v1477 = vunpack.c.l.b16 %v830
        %v1478 = vunpack.c.h.b16 %v830
        %v1479 = vunpack.c.l.b16 %v831
        %v1480 = vunpack.c.h.b16 %v831
        %v1481 = vunpack.c.l.b16 %v832
        %v1482 = vunpack.c.h.b16 %v832
        %v1483 = vunpack.c.l.b16 %v833
        %v1484 = vunpack.c.h.b16 %v833
        %v1485 = vunpack.c.l.b16 %v834
        %v1486 = vunpack.c.h.b16 %v834
        %v1487 = vunpack.c.l.b16 %v835
        %v1488 = vunpack.c.h.b16 %v835
        %v1489 = vunpack.c.l.b16 %v836
        %v1490 = vunpack.c.h.b16 %v836
        %v1491 = vunpack.c.l.b16 %v837
        %v1492 = vunpack.c.h.b16 %v837
        %v1493 = vunpack.c.l.b16 %v838
        %v1494 = vunpack.c.h.b16 %v838
        %v1495 = vunpack.c.l.b16 %v839
        %v1496 = vunpack.c.h.b16 %v839
        %v1497 = vunpack.c.l.b16 %v840
        %v1498 = vunpack.c.h.b16 %v840
        %v1499 = vunpack.c.l.b16 %v841
        %v1500 = vunpack.c.h.b16 %v841
        %v1501 = vunpack.c.l.b16 %v842
        %v1502 = vunpack.c.h.b16 %v842
        %v1503 = vunpack.c.l.b16 %v843
        %v1504 = vunpack.c.h.b16 %v843
        %v1505 = vunpack.c.l.b16 %v844
        %v1506 = vunpack.c.h.b16 %v844
        %v1507 = vunpack.c.l.b16 %v845
        %v1508 = vunpack.c.h.b16 %v845
        %v1509 = vunpack.c.l.b16 %v846
        %v1510 = vunpack.c.h.b16 %v846
        %v1511 = vunpack.c.l.b16 %v847
        %v1512 = vunpack.c.h.b16 %v847
        %v1513 = vunpack.c.l.b16 %v848
        %v1514 = vunpack.c.h.b16 %v848
        %v1515 = vunpack.c.l.b16 %v849
        %v1516 = vunpack.c.h.b16 %v849
        %v1517 = vunpack.c.l.b16 %v850
        %v1518 = vunpack.c.h.b16 %v850
        %v1519 = vunpack.c.l.b16 %v851
        %v1520 = vunpack.c.h.b16 %v851
        %v1521 = vunpack.c.l.b16 %v852
        %v1522 = vunpack.c.h.b16 %v852
        %v1523 = vunpack.c.l.b16 %v853
        %v1524 = vunpack.c.h.b16 %v853
        %v1525 = vunpack.c.l.b16 %v854
        %v1526 = vunpack.c.h.b16 %v854
        %v1527 = vunpack.c.l.b16 %v855
        %v1528 = vunpack.c.h.b16 %v855
        %v1529 = vunpack.c.l.b16 %v856
        %v1530 = vunpack.c.h.b16 %v856
        %v1531 = vunpack.c.l.b16 %v857
        %v1532 = vunpack.c.h.b16 %v857
        %v1533 = vunpack.c.l.b16 %v858
        %v1534 = vunpack.c.h.b16 %v858
        %v1535 = vunpack.c.l.b16 %v859
        %v1536 = vunpack.c.h.b16 %v859
        %v1537 = vunpack.c.l.b16 %v860
        %v1538 = vunpack.c.h.b16 %v860
        %v1539 = vunpack.c.l.b16 %v861
        %v1540 = vunpack.c.h.b16 %v861
        %v1541 = vunpack.c.l.b16 %v862
        %v1542 = vunpack.c.h.b16 %v862
        %v1543 = vunpack.c.l.b16 %v863
        %v1544 = vunpack.c.h.b16 %v863
        %v1545 = vunpack.c.l.b16 %v864
        %v1546 = vunpack.c.h.b16 %v864
        %v1547 = vunpack.c.l.b16 %v865
        %v1548 = vunpack.c.h.b16 %v865
        %v1549 = vunpack.c.l.b16 %v866
        %v1550 = vunpack.c.h.b16 %v866
        %v1551 = vunpack.c.l.b16 %v867
        %v1552 = vunpack.c.h.b16 %v867
        %v1553 = vunpack.c.l.b16 %v868
        %v1554 = vunpack.c.h.b16 %v868
        %v1555 = vunpack.c.l.b16 %v869
        %v1556 = vunpack.c.h.b16 %v869
        %v1557 = vunpack.c.l.b16 %v870
        %v1558 = vunpack.c.h.b16 %v870
        %v1559 = vunpack.c.l.b16 %v871
        %v1560 = vunpack.c.h.b16 %v871
        %v1561 = vunpack.c.l.b16 %v872
        %v1562 = vunpack.c.h.b16 %v872
        %v1563 = vunpack.c.l.b16 %v873
        %v1564 = vunpack.c.h.b16 %v873
        %v1565 = vunpack.c.l.b16 %v874
        %v1566 = vunpack.c.h.b16 %v874
        %v1567 = vunpack.c.l.b16 %v875
        %v1568 = vunpack.c.h.b16 %v875
        %v1569 = vunpack.c.l.b16 %v876
        %v1570 = vunpack.c.h.b16 %v876
        %v1571 = vunpack.c.l.b16 %v877
        %v1572 = vunpack.c.h.b16 %v877
        %v1573 = vunpack.c.l.b16 %v878
        %v1574 = vunpack.c.h.b16 %v878
        %v1575 = vunpack.c.l.b16 %v879
        %v1576 = vunpack.c.h.b16 %v879
        %v1577 = vunpack.c.l.b16 %v880
        %v1578 = vunpack.c.h.b16 %v880
        %v1579 = vunpack.c.l.b16 %v881
        %v1580 = vunpack.c.h.b16 %v881
        %v1581 = vunpack.c.l.b16 %v882
        %v1582 = vunpack.c.h.b16 %v882
        %v1583 = vunpack.c.l.b16 %v883
        %v1584 = vunpack.c.h.b16 %v883
        %v1585 = vunpack.c.l.b16 %v884
        %v1586 = vunpack.c.h.b16 %v884
        %v1587 = vunpack.c.l.b16 %v885
        %v1588 = vunpack.c.h.b16 %v885
        %v1589 = vunpack.c.l.b16 %v886
        %v1590 = vunpack.c.h.b16 %v886
        %v1591 = vunpack.c.l.b16 %v887
        %v1592 = vunpack.c.h.b16 %v887
        %v1593 = vunpack.c.l.b16 %v888
        %v1594 = vunpack.c.h.b16 %v888
        %v1595 = vunpack.c.l.b16 %v889
        %v1596 = vunpack.c.h.b16 %v889
        %v1597 = vunpack.c.l.b16 %v890
        %v1598 = vunpack.c.h.b16 %v890
        %v1599 = vunpack.c.l.b16 %v891
        %v1600 = vunpack.c.h.b16 %v891
        %v1601 = vunpack.c.l.b16 %v892
        %v1602 = vunpack.c.h.b16 %v892
        %v1603 = vunpack.c.l.b16 %v893
        %v1604 = vunpack.c.h.b16 %v893
        %v1605 = vunpack.c.l.b16 %v894
        %v1606 = vunpack.c.h.b16 %v894
        %v1607 = vunpack.c.l.b16 %v895
        %v1608 = vunpack.c.h.b16 %v895
        %v1609 = vunpack.c.l.b16 %v896
        %v1610 = vunpack.c.h.b16 %v896
        %v1611 = vunpack.c.l.b16 %v897
        %v1612 = vunpack.c.h.b16 %v897
        %v1613 = vunpack.c.l.b16 %v898
        %v1614 = vunpack.c.h.b16 %v898
        %v1615 = vunpack.c.l.b16 %v899
        %v1616 = vunpack.c.h.b16 %v899
        %v1617 = vunpack.c.l.b16 %v900
        %v1618 = vunpack.c.h.b16 %v900
        %v1619 = vunpack.c.l.b16 %v901
        %v1620 = vunpack.c.h.b16 %v901
        %v1621 = vunpack.c.l.b16 %v902
        %v1622 = vunpack.c.h.b16 %v902
        %v1623 = vunpack.c.l.b16 %v903
        %v1624 = vunpack.c.h.b16 %v903
        %v1625 = vunpack.c.l.b16 %v904
        %v1626 = vunpack.c.h.b16 %v904
        %v1627 = vunpack.c.l.b16 %v905
        %v1628 = vunpack.c.h.b16 %v905
        %v1629 = vunpack.c.l.b16 %v906
        %v1630 = vunpack.c.h.b16 %v906
        %v1631 = vunpack.c.l.b16 %v907
        %v1632 = vunpack.c.h.b16 %v907
        %v1633 = vunpack.c.l.b16 %v908
        %v1634 = vunpack.c.h.b16 %v908
        %v1635 = vunpack.c.l.b16 %v909
        %v1636 = vunpack.c.h.b16 %v909
        %v1637 = vunpack.c.l.b16 %v910
        %v1638 = vunpack.c.h.b16 %v910
        %v1639 = vunpack.c.l.b16 %v911
        %v1640 = vunpack.c.h.b16 %v911
        %v1641 = vunpack.c.l.b16 %v912
        %v1642 = vunpack.c.h.b16 %v912
        %v1643 = vunpack.c.l.b16 %v913
        %v1644 = vunpack.c.h.b16 %v913
        %v1645 = vunpack.c.l.b16 %v914
        %v1646 = vunpack.c.h.b16 %v914
        %v1647 = vunpack.c.l.b16 %v915
        %v1648 = vunpack.c.h.b16 %v915
        %v1649 = vunpack.c.l.b16 %v916
        %v1650 = vunpack.c.h.b16 %v916
        %v1651 = vunpack.c.l.b16 %v917
        %v1652 = vunpack.c.h.b16 %v917
        %v1653 = vunpack.c.l.b16 %v918
        %v1654 = vunpack.c.h.b16 %v918
        %v1655 = vunpack.c.l.b16 %v919
        %v1656 = vunpack.c.h.b16 %v919
        %v1657 = vunpack.c.l.b16 %v920
        %v1658 = vunpack.c.h.b16 %v920
        %v1659 = vunpack.c.l.b16 %v921
        %v1660 = vunpack.c.h.b16 %v921
        %v1661 = vunpack.c.l.b16 %v922
        %v1662 = vunpack.c.h.b16 %v922
        %v1663 = vunpack.c.l.b16 %v923
        %v1664 = vunpack.c.h.b16 %v923
        %v1665 = vunpack.c.l.b16 %v924
        %v1666 = vunpack.c.h.b16 %v924
        %v1667 = vunpack.c.l.b16 %v925
        %v1668 = vunpack.c.h.b16 %v925
        %v1669 = vunpack.c.l.b16 %v926
        %v1670 = vunpack.c.h.b16 %v926
        %v1671 = vunpack.c.l.b16 %v927
        %v1672 = vunpack.c.h.b16 %v927
        %v1673 = vunpack.c.l.b16 %v928
        %v1674 = vunpack.c.h.b16 %v928
        %v1675 = vunpack.c.l.b16 %v929
        %v1676 = vunpack.c.h.b16 %v929
        %v1677 = vunpack.c.l.b16 %v930
        %v1678 = vunpack.c.h.b16 %v930
        %v1679 = vunpack.c.l.b16 %v931
        %v1680 = vunpack.c.h.b16 %v931
        %v1681 = vunpack.c.l.b16 %v932
        %v1682 = vunpack.c.h.b16 %v932
        %v1683 = vunpack.c.l.b16 %v933
        %v1684 = vunpack.c.h.b16 %v933
        %v1685 = vunpack.c.l.b16 %v934
        %v1686 = vunpack.c.h.b16 %v934
        %v1687 = vunpack.c.l.b16 %v935
        %v1688 = vunpack.c.h.b16 %v935
        %v1689 = vunpack.c.l.b16 %v936
        %v1690 = vunpack.c.h.b16 %v936
        %v1691 = vunpack.c.l.b16 %v937
        %v1692 = vunpack.c.h.b16 %v937
        %v1693 = vunpack.c.l.b16 %v938
        %v1694 = vunpack.c.h.b16 %v938
        %v1695 = vunpack.c.l.b16 %v939
        %v1696 = vunpack.c.h.b16 %v939
        %v1697 = vunpack.c.l.b16 %v940
        %v1698 = vunpack.c.h.b16 %v940
        %v1699 = vunpack.c.l.b16 %v941
        %v1700 = vunpack.c.h.b16 %v941
        %v1701 = vunpack.c.l.b16 %v942
        %v1702 = vunpack.c.h.b16 %v942
        %v1703 = vunpack.c.l.b16 %v943
        %v1704 = vunpack.c.h.b16 %v943
        %v1705 = vunpack.c.l.b16 %v944
        %v1706 = vunpack.c.h.b16 %v944
        %v1707 = vunpack.c.l.b16 %v945
        %v1708 = vunpack.c.h.b16 %v945
        %v1709 = vunpack.c.l.b16 %v946
        %v1710 = vunpack.c.h.b16 %v946
        %v1711 = vunpack.c.l.b16 %v947
        %v1712 = vunpack.c.h.b16 %v947
        %v1713 = vunpack.c.l.b16 %v948
        %v1714 = vunpack.c.h.b16 %v948
        %v1715 = vunpack.c.l.b16 %v949
        %v1716 = vunpack.c.h.b16 %v949
        %v1717 = vunpack.c.l.b16 %v950
        %v1718 = vunpack.c.h.b16 %v950
        %v1719 = vunpack.c.l.b16 %v951
        %v1720 = vunpack.c.h.b16 %v951
        %v1721 = vunpack.c.l.b16 %v952
        %v1722 = vunpack.c.h.b16 %v952
        %v1723 = vunpack.c.l.b16 %v953
        %v1724 = vunpack.c.h.b16 %v953
        %v1725 = vunpack.c.l.b16 %v954
        %v1726 = vunpack.c.h.b16 %v954
        %v1727 = vunpack.c.l.b16 %v955
        %v1728 = vunpack.c.h.b16 %v955
        %v1729 = vunpack.c.l.b16 %v956
        %v1730 = vunpack.c.h.b16 %v956
        %v1731 = vunpack.c.l.b16 %v957
        %v1732 = vunpack.c.h.b16 %v957
        %v1733 = vunpack.c.l.b16 %v958
        %v1734 = vunpack.c.h.b16 %v958
        %v1735 = vunpack.c.l.b16 %v959
        %v1736 = vunpack.c.h.b16 %v959
        %v1737 = vunpack.c.l.b16 %v960
        %v1738 = vunpack.c.h.b16 %v960
        %v1739 = vunpack.c.l.b16 %v961
        %v1740 = vunpack.c.h.b16 %v961
        %v1741 = vunpack.c.l.b16 %v962
        %v1742 = vunpack.c.h.b16 %v962
        %v1743 = vunpack.c.l.b16 %v963
        %v1744 = vunpack.c.h.b16 %v963
        %v1745 = vunpack.c.l.b16 %v964
        %v1746 = vunpack.c.h.b16 %v964
        %v1747 = vunpack.c.l.b16 %v965
        %v1748 = vunpack.c.h.b16 %v965
        %v1749 = vunpack.c.l.b16 %v966
        %v1750 = vunpack.c.h.b16 %v966
        %v1751 = vunpack.c.l.b16 %v967
        %v1752 = vunpack.c.h.b16 %v967
        %v1753 = vunpack.c.l.b16 %v968
        %v1754 = vunpack.c.h.b16 %v968
        %v1755 = vunpack.c.l.b16 %v969
        %v1756 = vunpack.c.h.b16 %v969
        %v1757 = vunpack.c.l.b16 %v970
        %v1758 = vunpack.c.h.b16 %v970
        %v1759 = vunpack.c.l.b16 %v971
        %v1760 = vunpack.c.h.b16 %v971
        %v1761 = vunpack.c.l.b16 %v972
        %v1762 = vunpack.c.h.b16 %v972
        %v1763 = vpack.c.b16 %v1255, %v1251
        %v1764 = vpack.c.b16 %v1256, %v1252
        %v1765 = vpack.c.b16 %v1257, %v1253
        %v1766 = vpack.c.b16 %v1258, %v1254
        %v1767 = vpack.c.b16 %v1263, %v1259
        %v1768 = vpack.c.b16 %v1264, %v1260
        %v1769 = vpack.c.b16 %v1265, %v1261
        %v1770 = vpack.c.b16 %v1266, %v1262
        %v1771 = vpack.c.b16 %v1271, %v1267
        %v1772 = vpack.c.b16 %v1272, %v1268
        %v1773 = vpack.c.b16 %v1273, %v1269
        %v1774 = vpack.c.b16 %v1274, %v1270
        %v1775 = vpack.c.b16 %v1279, %v1275
        %v1776 = vpack.c.b16 %v1280, %v1276
        %v1777 = vpack.c.b16 %v1281, %v1277
        %v1778 = vpack.c.b16 %v1282, %v1278
        %v1779 = vpack.c.b16 %v1287, %v1283
        %v1780 = vpack.c.b16 %v1288, %v1284
        %v1781 = vpack.c.b16 %v1289, %v1285
        %v1782 = vpack.c.b16 %v1290, %v1286
        %v1783 = vpack.c.b16 %v1295, %v1291
        %v1784 = vpack.c.b16 %v1296, %v1292
        %v1785 = vpack.c.b16 %v1297, %v1293
        %v1786 = vpack.c.b16 %v1298, %v1294
        %v1787 = vpack.c.b16 %v1303, %v1299
        %v1788 = vpack.c.b16 %v1304, %v1300
        %v1789 = vpack.c.b16 %v1305, %v1301
        %v1790 = vpack.c.b16 %v1306, %v1302
        %v1791 = vpack.c.b16 %v1311, %v1307
        %v1792 = vpack.c.b16 %v1312, %v1308
        %v1793 = vpack.c.b16 %v1313, %v1309
        %v1794 = vpack.c.b16 %v1314, %v1310
        %v1795 = vpack.c.b16 %v1319, %v1315
        %v1796 = vpack.c.b16 %v1320, %v1316
        %v1797 = vpack.c.b16 %v1321, %v1317
        %v1798 = vpack.c.b16 %v1322, %v1318
        %v1799 = vpack.c.b16 %v1327, %v1323
        %v1800 = vpack.c.b16 %v1328, %v1324
        %v1801 = vpack.c.b16 %v1329, %v1325
        %v1802 = vpack.c.b16 %v1330, %v1326
        %v1803 = vpack.c.b16 %v1335, %v1331
        %v1804 = vpack.c.b16 %v1336, %v1332
        %v1805 = vpack.c.b16 %v1337, %v1333
        %v1806 = vpack.c.b16 %v1338, %v1334
        %v1807 = vpack.c.b16 %v1343, %v1339
        %v1808 = vpack.c.b16 %v1344, %v1340
        %v1809 = vpack.c.b16 %v1345, %v1341
        %v1810 = vpack.c.b16 %v1346, %v1342
        %v1811 = vpack.c.b16 %v1351, %v1347
        %v1812 = vpack.c.b16 %v1352, %v1348
        %v1813 = vpack.c.b16 %v1353, %v1349
        %v1814 = vpack.c.b16 %v1354, %v1350
        %v1815 = vpack.c.b16 %v1359, %v1355
        %v1816 = vpack.c.b16 %v1360, %v1356
        %v1817 = vpack.c.b16 %v1361, %v1357
        %v1818 = vpack.c.b16 %v1362, %v1358
        %v1819 = vpack.c.b16 %v1367, %v1363
        %v1820 = vpack.c.b16 %v1368, %v1364
        %v1821 = vpack.c.b16 %v1369, %v1365
        %v1822 = vpack.c.b16 %v1370, %v1366
        %v1823 = vpack.c.b16 %v1375, %v1371
        %v1824 = vpack.c.b16 %v1376, %v1372
        %v1825 = vpack.c.b16 %v1377, %v1373
        %v1826 = vpack.c.b16 %v1378, %v1374
        %v1827 = vpack.c.b16 %v1383, %v1379
        %v1828 = vpack.c.b16 %v1384, %v1380
        %v1829 = vpack.c.b16 %v1385, %v1381
        %v1830 = vpack.c.b16 %v1386, %v1382
        %v1831 = vpack.c.b16 %v1391, %v1387
        %v1832 = vpack.c.b16 %v1392, %v1388
        %v1833 = vpack.c.b16 %v1393, %v1389
        %v1834 = vpack.c.b16 %v1394, %v1390
        %v1835 = vpack.c.b16 %v1399, %v1395
        %v1836 = vpack.c.b16 %v1400, %v1396
        %v1837 = vpack.c.b16 %v1401, %v1397
        %v1838 = vpack.c.b16 %v1402, %v1398
        %v1839 = vpack.c.b16 %v1407, %v1403
        %v1840 = vpack.c.b16 %v1408, %v1404
        %v1841 = vpack.c.b16 %v1409, %v1405
        %v1842 = vpack.c.b16 %v1410, %v1406
        %v1843 = vpack.c.b16 %v1415, %v1411
        %v1844 = vpack.c.b16 %v1416, %v1412
        %v1845 = vpack.c.b16 %v1417, %v1413
        %v1846 = vpack.c.b16 %v1418, %v1414
        %v1847 = vpack.c.b16 %v1423, %v1419
        %v1848 = vpack.c.b16 %v1424, %v1420
        %v1849 = vpack.c.b16 %v1425, %v1421
        %v1850 = vpack.c.b16 %v1426, %v1422
        %v1851 = vpack.c.b16 %v1431, %v1427
        %v1852 = vpack.c.b16 %v1432, %v1428
        %v1853 = vpack.c.b16 %v1433, %v1429
        %v1854 = vpack.c.b16 %v1434, %v1430
        %v1855 = vpack.c.b16 %v1439, %v1435
        %v1856 = vpack.c.b16 %v1440, %v1436
        %v1857 = vpack.c.b16 %v1441, %v1437
        %v1858 = vpack.c.b16 %v1442, %v1438
        %v1859 = vpack.c.b16 %v1447, %v1443
        %v1860 = vpack.c.b16 %v1448, %v1444
        %v1861 = vpack.c.b16 %v1449, %v1445
        %v1862 = vpack.c.b16 %v1450, %v1446
        %v1863 = vpack.c.b16 %v1455, %v1451
        %v1864 = vpack.c.b16 %v1456, %v1452
        %v1865 = vpack.c.b16 %v1457, %v1453
        %v1866 = vpack.c.b16 %v1458, %v1454
        %v1867 = vpack.c.b16 %v1463, %v1459
        %v1868 = vpack.c.b16 %v1464, %v1460
        %v1869 = vpack.c.b16 %v1465, %v1461
        %v1870 = vpack.c.b16 %v1466, %v1462
        %v1871 = vpack.c.b16 %v1471, %v1467
        %v1872 = vpack.c.b16 %v1472, %v1468
        %v1873 = vpack.c.b16 %v1473, %v1469
        %v1874 = vpack.c.b16 %v1474, %v1470
        %v1875 = vpack.c.b16 %v1479, %v1475
        %v1876 = vpack.c.b16 %v1480, %v1476
        %v1877 = vpack.c.b16 %v1481, %v1477
        %v1878 = vpack.c.b16 %v1482, %v1478
        %v1879 = vpack.c.b16 %v1487, %v1483
        %v1880 = vpack.c.b16 %v1488, %v1484
        %v1881 = vpack.c.b16 %v1489, %v1485
        %v1882 = vpack.c.b16 %v1490, %v1486
        %v1883 = vpack.c.b16 %v1495, %v1491
        %v1884 = vpack.c.b16 %v1496, %v1492
        %v1885 = vpack.c.b16 %v1497, %v1493
        %v1886 = vpack.c.b16 %v1498, %v1494
        %v1887 = vpack.c.b16 %v1503, %v1499
        %v1888 = vpack.c.b16 %v1504, %v1500
        %v1889 = vpack.c.b16 %v1505, %v1501
        %v1890 = vpack.c.b16 %v1506, %v1502
        %v1891 = vpack.c.b16 %v1511, %v1507
        %v1892 = vpack.c.b16 %v1512, %v1508
        %v1893 = vpack.c.b16 %v1513, %v1509
        %v1894 = vpack.c.b16 %v1514, %v1510
        %v1895 = vpack.c.b16 %v1519, %v1515
        %v1896 = vpack.c.b16 %v1520, %v1516
        %v1897 = vpack.c.b16 %v1521, %v1517
        %v1898 = vpack.c.b16 %v1522, %v1518
        %v1899 = vpack.c.b16 %v1527, %v1523
        %v1900 = vpack.c.b16 %v1528, %v1524
        %v1901 = vpack.c.b16 %v1529, %v1525
        %v1902 = vpack.c.b16 %v1530, %v1526
        %v1903 = vpack.c.b16 %v1535, %v1531
        %v1904 = vpack.c.b16 %v1536, %v1532
        %v1905 = vpack.c.b16 %v1537, %v1533
        %v1906 = vpack.c.b16 %v1538, %v1534
        %v1907 = vpack.c.b16 %v1543, %v1539
        %v1908 = vpack.c.b16 %v1544, %v1540
        %v1909 = vpack.c.b16 %v1545, %v1541
        %v1910 = vpack.c.b16 %v1546, %v1542
        %v1911 = vpack.c.b16 %v1551, %v1547
        %v1912 = vpack.c.b16 %v1552, %v1548
        %v1913 = vpack.c.b16 %v1553, %v1549
        %v1914 = vpack.c.b16 %v1554, %v1550
        %v1915 = vpack.c.b16 %v1559, %v1555
        %v1916 = vpack.c.b16 %v1560, %v1556
        %v1917 = vpack.c.b16 %v1561, %v1557
        %v1918 = vpack.c.b16 %v1562, %v1558
        %v1919 = vpack.c.b16 %v1567, %v1563
        %v1920 = vpack.c.b16 %v1568, %v1564
        %v1921 = vpack.c.b16 %v1569, %v1565
        %v1922 = vpack.c.b16 %v1570, %v1566
        %v1923 = vpack.c.b16 %v1575, %v1571
        %v1924 = vpack.c.b16 %v1576, %v1572
        %v1925 = vpack.c.b16 %v1577, %v1573
        %v1926 = vpack.c.b16 %v1578, %v1574
        %v1927 = vpack.c.b16 %v1583, %v1579
        %v1928 = vpack.c.b16 %v1584, %v1580
        %v1929 = vpack.c.b16 %v1585, %v1581
        %v1930 = vpack.c.b16 %v1586, %v1582
        %v1931 = vpack.c.b16 %v1591, %v1587
        %v1932 = vpack.c.b16 %v1592, %v1588
        %v1933 = vpack.c.b16 %v1593, %v1589
        %v1934 = vpack.c.b16 %v1594, %v1590
        %v1935 = vpack.c.b16 %v1599, %v1595
        %v1936 = vpack.c.b16 %v1600, %v1596
        %v1937 = vpack.c.b16 %v1601, %v1597
        %v1938 = vpack.c.b16 %v1602, %v1598
        %v1939 = vpack.c.b16 %v1607, %v1603
        %v1940 = vpack.c.b16 %v1608, %v1604
        %v1941 = vpack.c.b16 %v1609, %v1605
        %v1942 = vpack.c.b16 %v1610, %v1606
        %v1943 = vpack.c.b16 %v1615, %v1611
        %v1944 = vpack.c.b16 %v1616, %v1612
        %v1945 = vpack.c.b16 %v1617, %v1613
        %v1946 = vpack.c.b16 %v1618, %v1614
        %v1947 = vpack.c.b16 %v1623, %v1619
        %v1948 = vpack.c.b16 %v1624, %v1620
        %v1949 = vpack.c.b16 %v1625, %v1621
        %v1950 = vpack.c.b16 %v1626, %v1622
        %v1951 = vpack.c.b16 %v1631, %v1627
        %v1952 = vpack.c.b16 %v1632, %v1628
        %v1953 = vpack.c.b16 %v1633, %v1629
        %v1954 = vpack.c.b16 %v1634, %v1630
        %v1955 = vpack.c.b16 %v1639, %v1635
        %v1956 = vpack.c.b16 %v1640, %v1636
        %v1957 = vpack.c.b16 %v1641, %v1637
        %v1958 = vpack.c.b16 %v1642, %v1638
        %v1959 = vpack.c.b16 %v1647, %v1643
        %v1960 = vpack.c.b16 %v1648, %v1644
        %v1961 = vpack.c.b16 %v1649, %v1645
        %v1962 = vpack.c.b16 %v1650, %v1646
        %v1963 = vpack.c.b16 %v1655, %v1651
        %v1964 = vpack.c.b16 %v1656, %v1652
        %v1965 = vpack.c.b16 %v1657, %v1653
        %v1966 = vpack.c.b16 %v1658, %v1654
        %v1967 = vpack.c.b16 %v1663, %v1659
        %v1968 = vpack.c.b16 %v1664, %v1660
        %v1969 = vpack.c.b16 %v1665, %v1661
        %v1970 = vpack.c.b16 %v1666, %v1662
        %v1971 = vpack.c.b16 %v1671, %v1667
        %v1972 = vpack.c.b16 %v1672, %v1668
        %v1973 = vpack.c.b16 %v1673, %v1669
        %v1974 = vpack.c.b16 %v1674, %v1670
        %v1975 = vpack.c.b16 %v1679, %v1675
        %v1976 = vpack.c.b16 %v1680, %v1676
        %v1977 = vpack.c.b16 %v1681, %v1677
        %v1978 = vpack.c.b16 %v1682, %v1678
        %v1979 = vpack.c.b16 %v1687, %v1683
        %v1980 = vpack.c.b16 %v1688, %v1684
        %v1981 = vpack.c.b16 %v1689, %v1685
        %v1982 = vpack.c.b16 %v1690, %v1686
        %v1983 = vpack.c.b16 %v1695, %v1691
        %v1984 = vpack.c.b16 %v1696, %v1692
        %v1985 = vpack.c.b16 %v1697, %v1693
        %v1986 = vpack.c.b16 %v1698, %v1694
        %v1987 = vpack.c.b16 %v1703, %v1699
        %v1988 = vpack.c.b16 %v1704, %v1700
        %v1989 = vpack.c.b16 %v1705, %v1701
        %v1990 = vpack.c.b16 %v1706, %v1702
        %v1991 = vpack.c.b16 %v1711, %v1707
        %v1992 = vpack.c.b16 %v1712, %v1708
        %v1993 = vpack.c.b16 %v1713, %v1709
        %v1994 = vpack.c.b16 %v1714, %v1710
        %v1995 = vpack.c.b16 %v1719, %v1715
        %v1996 = vpack.c.b16 %v1720, %v1716
        %v1997 = vpack.c.b16 %v1721, %v1717
        %v1998 = vpack.c.b16 %v1722, %v1718
        %v1999 = vpack.c.b16 %v1727, %v1723
        %v2000 = vpack.c.b16 %v1728, %v1724
        %v2001 = vpack.c.b16 %v1729, %v1725
        %v2002 = vpack.c.b16 %v1730, %v1726
        %v2003 = vpack.c.b16 %v1735, %v1731
        %v2004 = vpack.c.b16 %v1736, %v1732
        %v2005 = vpack.c.b16 %v1737, %v1733
        %v2006 = vpack.c.b16 %v1738, %v1734
        %v2007 = vpack.c.b16 %v1743, %v1739
        %v2008 = vpack.c.b16 %v1744, %v1740
        %v2009 = vpack.c.b16 %v1745, %v1741
        %v2010 = vpack.c.b16 %v1746, %v1742
        %v2011 = vpack.c.b16 %v1751, %v1747
        %v2012 = vpack.c.b16 %v1752, %v1748
        %v2013 = vpack.c.b16 %v1753, %v1749
        %v2014 = vpack.c.b16 %v1754, %v1750
        %v2015 = vpack.c.b16 %v1759, %v1755
        %v2016 = vpack.c.b16 %v1760, %v1756
        %v2017 = vpack.c.b16 %v1761, %v1757
        %v2018 = vpack.c.b16 %v1762, %v1758
        %2275 = vmatprep.subr.bf16.mxu0 %v1792
        %2276 = vmatpush1.bf16.msra.mxu0 %v1791
        %2277 = vmatprep.subr.bf16.mxu0 %v1788
        %2278 = vmatpush1.bf16.msra.mxu0 %v1787
        %2279 = vmatprep.subr.bf16.mxu0 %v1784
        %2280 = vmatpush1.bf16.msra.mxu0 %v1783
        %2281 = vmatprep.subr.bf16.mxu0 %v1780
        %2282 = vmatpush1.bf16.msra.mxu0 %v1779
        %2283 = vmatprep.subr.bf16.mxu0 %v1776
        %2284 = vmatpush1.bf16.msra.mxu0 %v1775
        %2285 = vmatprep.subr.bf16.mxu0 %v1772
        %2286 = vmatpush1.bf16.msra.mxu0 %v1771
        %2287 = vmatprep.subr.bf16.mxu0 %v1768
        %2288 = vmatpush1.bf16.msra.mxu0 %v1767
        %2289 = vmatprep.subr.bf16.mxu0 %v1764
        %2290 = vmatpush1.bf16.msra.mxu0 %v1763
        %2291 = vmatprep.subr.bf16.mxu0 %v1824
        %2292 = vmatpush2.bf16.msra.mxu0 %v1823
        %2293 = vmatprep.subr.bf16.mxu0 %v1820
        %2294 = vmatpush2.bf16.msra.mxu0 %v1819
        %2295 = vmatprep.subr.bf16.mxu0 %v1816
        %2296 = vmatpush2.bf16.msra.mxu0 %v1815
        %2297 = vmatprep.subr.bf16.mxu0 %v1812
        %2298 = vmatpush2.bf16.msra.mxu0 %v1811
        %2299 = vmatprep.subr.bf16.mxu0 %v1808
        %2300 = vmatpush2.bf16.msra.mxu0 %v1807
        %2301 = vmatprep.subr.bf16.mxu0 %v1804
        %2302 = vmatpush2.bf16.msra.mxu0 %v1803
        %2303 = vmatprep.subr.bf16.mxu0 %v1800
        %2304 = vmatpush2.bf16.msra.mxu0 %v1799
        %2305 = vmatprep.subr.bf16.mxu0 %v1796
        %2306 = vmatpush2.bf16.msra.mxu0 %v1795
        %2307 = vmatprep.mubr.bf16.mxu0 %v710
        %2308 = vmatmul.mubr.bf16.gmra.mxu0 %v709
        %v2309 = vpop.f32.mrf.mxu0
        %v2310 = vadd.f32 %v978, %v2309
        %v2311 = vpop.f32.mrf.mxu0
        %v2312 = vadd.f32 %v982, %v2311
        %v2313 = vpop.f32.mrf.mxu0
        %v2314 = vpop.f32.mrf.mxu0
        %2315 = vdwg.mxu0
        %2316 = vmatprep.subr.bf16.mxu0 %v1856
        %2317 = vmatpush1.bf16.msra.mxu0 %v1855
        %2318 = vmatprep.subr.bf16.mxu0 %v1852
        %2319 = vmatpush1.bf16.msra.mxu0 %v1851
        %2320 = vmatprep.subr.bf16.mxu0 %v1848
        %2321 = vmatpush1.bf16.msra.mxu0 %v1847
        %2322 = vmatprep.subr.bf16.mxu0 %v1844
        %2323 = vmatpush1.bf16.msra.mxu0 %v1843
        %2324 = vmatprep.subr.bf16.mxu0 %v1840
        %2325 = vmatpush1.bf16.msra.mxu0 %v1839
        %2326 = vmatprep.subr.bf16.mxu0 %v1836
        %2327 = vmatpush1.bf16.msra.mxu0 %v1835
        %2328 = vmatprep.subr.bf16.mxu0 %v1832
        %2329 = vmatpush1.bf16.msra.mxu0 %v1831
        %2330 = vmatprep.subr.bf16.mxu0 %v1828
        %2331 = vmatpush1.bf16.msra.mxu0 %v1827
        %2332 = vmatprep.subr.bf16.mxu0 %v1888
        %2333 = vmatpush2.bf16.msra.mxu0 %v1887
        %2334 = vmatprep.subr.bf16.mxu0 %v1884
        %2335 = vmatpush2.bf16.msra.mxu0 %v1883
        %2336 = vmatprep.subr.bf16.mxu0 %v1880
        %2337 = vmatpush2.bf16.msra.mxu0 %v1879
        %2338 = vmatprep.subr.bf16.mxu0 %v1876
        %2339 = vmatpush2.bf16.msra.mxu0 %v1875
        %2340 = vmatprep.subr.bf16.mxu0 %v1872
        %2341 = vmatpush2.bf16.msra.mxu0 %v1871
        %2342 = vmatprep.subr.bf16.mxu0 %v1868
        %2343 = vmatpush2.bf16.msra.mxu0 %v1867
        %2344 = vmatprep.subr.bf16.mxu0 %v1864
        %2345 = vmatpush2.bf16.msra.mxu0 %v1863
        %2346 = vmatprep.subr.bf16.mxu0 %v1860
        %2347 = vmatpush2.bf16.msra.mxu0 %v1859
        %2348 = vmatprep.mubr.bf16.mxu0 %v712
        %2349 = vmatmul.mubr.bf16.gmra.mxu0 %v711
        %v2350 = vpop.f32.mrf.mxu0
        %v2351 = vadd.f32 %v2310, %v2350
        %v2352 = vpop.f32.mrf.mxu0
        %v2353 = vadd.f32 %v2312, %v2352
        %v2354 = vpop.f32.mrf.mxu0
        %v2355 = vpop.f32.mrf.mxu0
        %2356 = vdwg.mxu0
        %2357 = vmatprep.subr.bf16.mxu0 %v1920
        %2358 = vmatpush1.bf16.msra.mxu0 %v1919
        %2359 = vmatprep.subr.bf16.mxu0 %v1916
        %2360 = vmatpush1.bf16.msra.mxu0 %v1915
        %2361 = vmatprep.subr.bf16.mxu0 %v1912
        %2362 = vmatpush1.bf16.msra.mxu0 %v1911
        %2363 = vmatprep.subr.bf16.mxu0 %v1908
        %2364 = vmatpush1.bf16.msra.mxu0 %v1907
        %2365 = vmatprep.subr.bf16.mxu0 %v1904
        %2366 = vmatpush1.bf16.msra.mxu0 %v1903
        %2367 = vmatprep.subr.bf16.mxu0 %v1900
        %2368 = vmatpush1.bf16.msra.mxu0 %v1899
        %2369 = vmatprep.subr.bf16.mxu0 %v1896
        %2370 = vmatpush1.bf16.msra.mxu0 %v1895
        %2371 = vmatprep.subr.bf16.mxu0 %v1892
        %2372 = vmatpush1.bf16.msra.mxu0 %v1891
        %2373 = vmatprep.subr.bf16.mxu0 %v1952
        %2374 = vmatpush2.bf16.msra.mxu0 %v1951
        %2375 = vmatprep.subr.bf16.mxu0 %v1948
        %2376 = vmatpush2.bf16.msra.mxu0 %v1947
        %2377 = vmatprep.subr.bf16.mxu0 %v1944
        %2378 = vmatpush2.bf16.msra.mxu0 %v1943
        %2379 = vmatprep.subr.bf16.mxu0 %v1940
        %2380 = vmatpush2.bf16.msra.mxu0 %v1939
        %2381 = vmatprep.subr.bf16.mxu0 %v1936
        %2382 = vmatpush2.bf16.msra.mxu0 %v1935
        %2383 = vmatprep.subr.bf16.mxu0 %v1932
        %2384 = vmatpush2.bf16.msra.mxu0 %v1931
        %2385 = vmatprep.subr.bf16.mxu0 %v1928
        %2386 = vmatpush2.bf16.msra.mxu0 %v1927
        %2387 = vmatprep.subr.bf16.mxu0 %v1924
        %2388 = vmatpush2.bf16.msra.mxu0 %v1923
        %2389 = vmatprep.mubr.bf16.mxu0 %v714
        %2390 = vmatmul.mubr.bf16.gmra.mxu0 %v713
        %v2391 = vpop.f32.mrf.mxu0
        %v2392 = vadd.f32 %v2351, %v2391
        %v2393 = vpop.f32.mrf.mxu0
        %v2394 = vadd.f32 %v2353, %v2393
        %v2395 = vpop.f32.mrf.mxu0
        %v2396 = vpop.f32.mrf.mxu0
        %2397 = vdwg.mxu0
        %2398 = vmatprep.subr.bf16.mxu0 %v1984
        %2399 = vmatpush1.bf16.msra.mxu0 %v1983
        %2400 = vmatprep.subr.bf16.mxu0 %v1980
        %2401 = vmatpush1.bf16.msra.mxu0 %v1979
        %2402 = vmatprep.subr.bf16.mxu0 %v1976
        %2403 = vmatpush1.bf16.msra.mxu0 %v1975
        %2404 = vmatprep.subr.bf16.mxu0 %v1972
        %2405 = vmatpush1.bf16.msra.mxu0 %v1971
        %2406 = vmatprep.subr.bf16.mxu0 %v1968
        %2407 = vmatpush1.bf16.msra.mxu0 %v1967
        %2408 = vmatprep.subr.bf16.mxu0 %v1964
        %2409 = vmatpush1.bf16.msra.mxu0 %v1963
        %2410 = vmatprep.subr.bf16.mxu0 %v1960
        %2411 = vmatpush1.bf16.msra.mxu0 %v1959
        %2412 = vmatprep.subr.bf16.mxu0 %v1956
        %2413 = vmatpush1.bf16.msra.mxu0 %v1955
        %2414 = vmatprep.subr.bf16.mxu0 %v2016
        %2415 = vmatpush2.bf16.msra.mxu0 %v2015
        %2416 = vmatprep.subr.bf16.mxu0 %v2012
        %2417 = vmatpush2.bf16.msra.mxu0 %v2011
        %2418 = vmatprep.subr.bf16.mxu0 %v2008
        %2419 = vmatpush2.bf16.msra.mxu0 %v2007
        %2420 = vmatprep.subr.bf16.mxu0 %v2004
        %2421 = vmatpush2.bf16.msra.mxu0 %v2003
        %2422 = vmatprep.subr.bf16.mxu0 %v2000
        %2423 = vmatpush2.bf16.msra.mxu0 %v1999
        %2424 = vmatprep.subr.bf16.mxu0 %v1996
        %2425 = vmatpush2.bf16.msra.mxu0 %v1995
        %2426 = vmatprep.subr.bf16.mxu0 %v1992
        %2427 = vmatpush2.bf16.msra.mxu0 %v1991
        %2428 = vmatprep.subr.bf16.mxu0 %v1988
        %2429 = vmatpush2.bf16.msra.mxu0 %v1987
        %2430 = vmatprep.mubr.bf16.mxu0 %v716
        %2431 = vmatmul.mubr.bf16.gmra.mxu0 %v715
        %v2432 = vpop.f32.mrf.mxu0
        %v2433 = vadd.f32 %v2392, %v2432
        %v2434 = vpop.f32.mrf.mxu0
        %v2435 = vadd.f32 %v2394, %v2434
        %v2436 = vpop.f32.mrf.mxu0
        %v2437 = vpop.f32.mrf.mxu0
        %2438 = vdwg.mxu0
        %2439 = vmatprep.subr.bf16.mxu0 %v1794
        %2440 = vmatpush1.bf16.msra.mxu0 %v1793
        %2441 = vmatprep.subr.bf16.mxu0 %v1790
        %2442 = vmatpush1.bf16.msra.mxu0 %v1789
        %2443 = vmatprep.subr.bf16.mxu0 %v1786
        %2444 = vmatpush1.bf16.msra.mxu0 %v1785
        %2445 = vmatprep.subr.bf16.mxu0 %v1782
        %2446 = vmatpush1.bf16.msra.mxu0 %v1781
        %2447 = vmatprep.subr.bf16.mxu0 %v1778
        %2448 = vmatpush1.bf16.msra.mxu0 %v1777
        %2449 = vmatprep.subr.bf16.mxu0 %v1774
        %2450 = vmatpush1.bf16.msra.mxu0 %v1773
        %2451 = vmatprep.subr.bf16.mxu0 %v1770
        %2452 = vmatpush1.bf16.msra.mxu0 %v1769
        %2453 = vmatprep.subr.bf16.mxu0 %v1766
        %2454 = vmatpush1.bf16.msra.mxu0 %v1765
        %2455 = vmatprep.subr.bf16.mxu0 %v1826
        %2456 = vmatpush2.bf16.msra.mxu0 %v1825
        %2457 = vmatprep.subr.bf16.mxu0 %v1822
        %2458 = vmatpush2.bf16.msra.mxu0 %v1821
        %2459 = vmatprep.subr.bf16.mxu0 %v1818
        %2460 = vmatpush2.bf16.msra.mxu0 %v1817
        %2461 = vmatprep.subr.bf16.mxu0 %v1814
        %2462 = vmatpush2.bf16.msra.mxu0 %v1813
        %2463 = vmatprep.subr.bf16.mxu0 %v1810
        %2464 = vmatpush2.bf16.msra.mxu0 %v1809
        %2465 = vmatprep.subr.bf16.mxu0 %v1806
        %2466 = vmatpush2.bf16.msra.mxu0 %v1805
        %2467 = vmatprep.subr.bf16.mxu0 %v1802
        %2468 = vmatpush2.bf16.msra.mxu0 %v1801
        %2469 = vmatprep.subr.bf16.mxu0 %v1798
        %2470 = vmatpush2.bf16.msra.mxu0 %v1797
        %2471 = vmatprep.mubr.bf16.mxu0 %v710
        %2472 = vmatmul.mubr.bf16.gmra.mxu0 %v709
        %v2473 = vpop.f32.mrf.mxu0
        %v2474 = vadd.f32 %v986, %v2473
        %v2475 = vpop.f32.mrf.mxu0
        %v2476 = vadd.f32 %v990, %v2475
        %v2477 = vpop.f32.mrf.mxu0
        %v2478 = vpop.f32.mrf.mxu0
        %2479 = vdwg.mxu0
        %2480 = vmatprep.subr.bf16.mxu0 %v1858
        %2481 = vmatpush1.bf16.msra.mxu0 %v1857
        %2482 = vmatprep.subr.bf16.mxu0 %v1854
        %2483 = vmatpush1.bf16.msra.mxu0 %v1853
        %2484 = vmatprep.subr.bf16.mxu0 %v1850
        %2485 = vmatpush1.bf16.msra.mxu0 %v1849
        %2486 = vmatprep.subr.bf16.mxu0 %v1846
        %2487 = vmatpush1.bf16.msra.mxu0 %v1845
        %2488 = vmatprep.subr.bf16.mxu0 %v1842
        %2489 = vmatpush1.bf16.msra.mxu0 %v1841
        %2490 = vmatprep.subr.bf16.mxu0 %v1838
        %2491 = vmatpush1.bf16.msra.mxu0 %v1837
        %2492 = vmatprep.subr.bf16.mxu0 %v1834
        %2493 = vmatpush1.bf16.msra.mxu0 %v1833
        %2494 = vmatprep.subr.bf16.mxu0 %v1830
        %2495 = vmatpush1.bf16.msra.mxu0 %v1829
        %2496 = vmatprep.subr.bf16.mxu0 %v1890
        %2497 = vmatpush2.bf16.msra.mxu0 %v1889
        %2498 = vmatprep.subr.bf16.mxu0 %v1886
        %2499 = vmatpush2.bf16.msra.mxu0 %v1885
        %2500 = vmatprep.subr.bf16.mxu0 %v1882
        %2501 = vmatpush2.bf16.msra.mxu0 %v1881
        %2502 = vmatprep.subr.bf16.mxu0 %v1878
        %2503 = vmatpush2.bf16.msra.mxu0 %v1877
        %2504 = vmatprep.subr.bf16.mxu0 %v1874
        %2505 = vmatpush2.bf16.msra.mxu0 %v1873
        %2506 = vmatprep.subr.bf16.mxu0 %v1870
        %2507 = vmatpush2.bf16.msra.mxu0 %v1869
        %2508 = vmatprep.subr.bf16.mxu0 %v1866
        %2509 = vmatpush2.bf16.msra.mxu0 %v1865
        %2510 = vmatprep.subr.bf16.mxu0 %v1862
        %2511 = vmatpush2.bf16.msra.mxu0 %v1861
        %2512 = vmatprep.mubr.bf16.mxu0 %v712
        %2513 = vmatmul.mubr.bf16.gmra.mxu0 %v711
        %v2514 = vpop.f32.mrf.mxu0
        %v2515 = vadd.f32 %v2474, %v2514
        %v2516 = vpop.f32.mrf.mxu0
        %v2517 = vadd.f32 %v2476, %v2516
        %v2518 = vpop.f32.mrf.mxu0
        %v2519 = vpop.f32.mrf.mxu0
        %2520 = vdwg.mxu0
        %2521 = vmatprep.subr.bf16.mxu0 %v1922
        %2522 = vmatpush1.bf16.msra.mxu0 %v1921
        %2523 = vmatprep.subr.bf16.mxu0 %v1918
        %2524 = vmatpush1.bf16.msra.mxu0 %v1917
        %2525 = vmatprep.subr.bf16.mxu0 %v1914
        %2526 = vmatpush1.bf16.msra.mxu0 %v1913
        %2527 = vmatprep.subr.bf16.mxu0 %v1910
        %2528 = vmatpush1.bf16.msra.mxu0 %v1909
        %2529 = vmatprep.subr.bf16.mxu0 %v1906
        %2530 = vmatpush1.bf16.msra.mxu0 %v1905
        %2531 = vmatprep.subr.bf16.mxu0 %v1902
        %2532 = vmatpush1.bf16.msra.mxu0 %v1901
        %2533 = vmatprep.subr.bf16.mxu0 %v1898
        %2534 = vmatpush1.bf16.msra.mxu0 %v1897
        %2535 = vmatprep.subr.bf16.mxu0 %v1894
        %2536 = vmatpush1.bf16.msra.mxu0 %v1893
        %2537 = vmatprep.subr.bf16.mxu0 %v1954
        %2538 = vmatpush2.bf16.msra.mxu0 %v1953
        %2539 = vmatprep.subr.bf16.mxu0 %v1950
        %2540 = vmatpush2.bf16.msra.mxu0 %v1949
        %2541 = vmatprep.subr.bf16.mxu0 %v1946
        %2542 = vmatpush2.bf16.msra.mxu0 %v1945
        %2543 = vmatprep.subr.bf16.mxu0 %v1942
        %2544 = vmatpush2.bf16.msra.mxu0 %v1941
        %2545 = vmatprep.subr.bf16.mxu0 %v1938
        %2546 = vmatpush2.bf16.msra.mxu0 %v1937
        %2547 = vmatprep.subr.bf16.mxu0 %v1934
        %2548 = vmatpush2.bf16.msra.mxu0 %v1933
        %2549 = vmatprep.subr.bf16.mxu0 %v1930
        %2550 = vmatpush2.bf16.msra.mxu0 %v1929
        %2551 = vmatprep.subr.bf16.mxu0 %v1926
        %2552 = vmatpush2.bf16.msra.mxu0 %v1925
        %2553 = vmatprep.mubr.bf16.mxu0 %v714
        %2554 = vmatmul.mubr.bf16.gmra.mxu0 %v713
        %v2555 = vpop.f32.mrf.mxu0
        %v2556 = vadd.f32 %v2515, %v2555
        %v2557 = vpop.f32.mrf.mxu0
        %v2558 = vadd.f32 %v2517, %v2557
        %v2559 = vpop.f32.mrf.mxu0
        %v2560 = vpop.f32.mrf.mxu0
        %2561 = vdwg.mxu0
        %2562 = vmatprep.subr.bf16.mxu0 %v1986
        %2563 = vmatpush1.bf16.msra.mxu0 %v1985
        %2564 = vmatprep.subr.bf16.mxu0 %v1982
        %2565 = vmatpush1.bf16.msra.mxu0 %v1981
        %2566 = vmatprep.subr.bf16.mxu0 %v1978
        %2567 = vmatpush1.bf16.msra.mxu0 %v1977
        %2568 = vmatprep.subr.bf16.mxu0 %v1974
        %2569 = vmatpush1.bf16.msra.mxu0 %v1973
        %2570 = vmatprep.subr.bf16.mxu0 %v1970
        %2571 = vmatpush1.bf16.msra.mxu0 %v1969
        %2572 = vmatprep.subr.bf16.mxu0 %v1966
        %2573 = vmatpush1.bf16.msra.mxu0 %v1965
        %2574 = vmatprep.subr.bf16.mxu0 %v1962
        %2575 = vmatpush1.bf16.msra.mxu0 %v1961
        %2576 = vmatprep.subr.bf16.mxu0 %v1958
        %2577 = vmatpush1.bf16.msra.mxu0 %v1957
        %2578 = vmatprep.subr.bf16.mxu0 %v2018
        %2579 = vmatpush2.bf16.msra.mxu0 %v2017
        %2580 = vmatprep.subr.bf16.mxu0 %v2014
        %2581 = vmatpush2.bf16.msra.mxu0 %v2013
        %2582 = vmatprep.subr.bf16.mxu0 %v2010
        %2583 = vmatpush2.bf16.msra.mxu0 %v2009
        %2584 = vmatprep.subr.bf16.mxu0 %v2006
        %2585 = vmatpush2.bf16.msra.mxu0 %v2005
        %2586 = vmatprep.subr.bf16.mxu0 %v2002
        %2587 = vmatpush2.bf16.msra.mxu0 %v2001
        %2588 = vmatprep.subr.bf16.mxu0 %v1998
        %2589 = vmatpush2.bf16.msra.mxu0 %v1997
        %2590 = vmatprep.subr.bf16.mxu0 %v1994
        %2591 = vmatpush2.bf16.msra.mxu0 %v1993
        %2592 = vmatprep.subr.bf16.mxu0 %v1990
        %2593 = vmatpush2.bf16.msra.mxu0 %v1989
        %2594 = vmatprep.mubr.bf16.mxu0 %v716
        %2595 = vmatmul.mubr.bf16.gmra.mxu0 %v715
        %v2596 = vpop.f32.mrf.mxu0
        %v2597 = vadd.f32 %v2556, %v2596
        %v2598 = vpop.f32.mrf.mxu0
        %v2599 = vadd.f32 %v2558, %v2598
        %v2600 = vpop.f32.mrf.mxu0
        %v2601 = vpop.f32.mrf.mxu0
        %2602 = vdwg.mxu0
        %v2603 = vld [vmem:[%s422] sm:$0xf]
        %2605 = vset.pattern.permute.xlu0 0
        %2606 = vperm.xlu0 %2605, %v708
        %v2607 = vpop.permute.xlu0 %2606
        %v2609 = vlaneseq
        %v2610 = vshrl.u32 %v2609, 7
        %v2611 = vsub.s32 0, %v2610
        %v2612 = vrot.slane %v2607, %v2611
        %v2613 = vmul.f32 %v2612, %v2603
        %v2615 = vlaneseq
        %v2616 = vshrl.u32 %v2615, 7
        %v2617 = vsub.s32 0, %v2616
        %v2618 = vrot.slane %v2613, %v2617
        %v2619 = vlaneseq
        %v2620 = vshrl.u32 %v2619, 7
        %v2621 = vsub.s32 1, %v2620
        %v2622 = vrot.slane %v2613, %v2621
        %v2623 = vlaneseq
        %v2624 = vshrl.u32 %v2623, 7
        %v2625 = vsub.s32 2, %v2624
        %v2626 = vrot.slane %v2613, %v2625
        %v2627 = vlaneseq
        %v2628 = vshrl.u32 %v2627, 7
        %v2629 = vsub.s32 3, %v2628
        %v2630 = vrot.slane %v2613, %v2629
        %v2635 = vadd.f32 %v2433, %v2618
        %v2636 = vadd.f32 %v2435, %v2622
        %v2637 = vadd.f32 %v2597, %v2626
        %v2638 = vadd.f32 %v2599, %v2630
        %vm2639 = vcmp.ge.f32.partialorder %v2635, 0.0
        %vm2640 = vcmp.ge.f32.partialorder %v2636, 0.0
        %vm2641 = vcmp.ge.f32.partialorder %v2637, 0.0
        %vm2642 = vcmp.ge.f32.partialorder %v2638, 0.0
        %v2643 = vmul.f32 %v2635, 0.2
        %v2644 = vmul.f32 %v2636, 0.2
        %v2645 = vmul.f32 %v2637, 0.2
        %v2646 = vmul.f32 %v2638, 0.2
        %v2647 = vsel %vm2639, %v2635, %v2643
        %v2648 = vsel %vm2640, %v2636, %v2644
        %v2649 = vsel %vm2641, %v2637, %v2645
        %v2650 = vsel %vm2642, %v2638, %v2646
        %v2651 = vld [vmem:[#allocation2] sm:$0xff]
        %v2652 = vld [vmem:[%s486] sm:$0xff]
        %v2653 = vld [vmem:[%s486 + $0x8] sm:$0xff]
        %v2654 = vld [vmem:[%s486 + $0x10] sm:$0xff]
        %v2655 = vld [vmem:[%s486 + $0x18] sm:$0xff]
        %v2656 = vld [vmem:[%s486 + $0x20] sm:$0xff]
        %v2657 = vld [vmem:[%s486 + $0x28] sm:$0xff]
        %v2658 = vld [vmem:[%s486 + $0x30] sm:$0xff]
        %v2659 = vld [vmem:[%s486 + $0x38] sm:$0xff]
        %v2660 = vld [vmem:[%s486 + $0x40] sm:$0xff]
        %v2661 = vld [vmem:[%s486 + $0x48] sm:$0xff]
        %v2662 = vld [vmem:[%s486 + $0x50] sm:$0xff]
        %v2663 = vld [vmem:[%s486 + $0x58] sm:$0xff]
        %v2664 = vld [vmem:[%s486 + $0x60] sm:$0xff]
        %v2665 = vld [vmem:[%s486 + $0x68] sm:$0xff]
        %v2666 = vld [vmem:[%s486 + $0x70] sm:$0xff]
        %v2667 = vld [vmem:[%s486 + $0x78] sm:$0xff]
        %v2668 = vld [vmem:[%s486 + $0x80] sm:$0xff]
        %v2669 = vld [vmem:[%s486 + $0x88] sm:$0xff]
        %v2670 = vld [vmem:[%s486 + $0x90] sm:$0xff]
        %v2671 = vld [vmem:[%s486 + $0x98] sm:$0xff]
        %v2672 = vld [vmem:[%s486 + $0xa0] sm:$0xff]
        %v2673 = vld [vmem:[%s486 + $0xa8] sm:$0xff]
        %v2674 = vld [vmem:[%s486 + $0xb0] sm:$0xff]
        %v2675 = vld [vmem:[%s486 + $0xb8] sm:$0xff]
        %v2676 = vld [vmem:[%s486 + $0xc0] sm:$0xff]
        %v2677 = vld [vmem:[%s486 + $0xc8] sm:$0xff]
        %v2678 = vld [vmem:[%s486 + $0xd0] sm:$0xff]
        %v2679 = vld [vmem:[%s486 + $0xd8] sm:$0xff]
        %v2680 = vld [vmem:[%s486 + $0xe0] sm:$0xff]
        %v2681 = vld [vmem:[%s486 + $0xe8] sm:$0xff]
        %v2682 = vld [vmem:[%s486 + $0xf0] sm:$0xff]
        %v2683 = vld [vmem:[%s486 + $0xf8] sm:$0xff]
        %v2684 = vld [vmem:[%s486 + $0x100] sm:$0xff]
        %v2685 = vld [vmem:[%s486 + $0x108] sm:$0xff]
        %v2686 = vld [vmem:[%s486 + $0x110] sm:$0xff]
        %v2687 = vld [vmem:[%s486 + $0x118] sm:$0xff]
        %v2688 = vld [vmem:[%s486 + $0x120] sm:$0xff]
        %v2689 = vld [vmem:[%s486 + $0x128] sm:$0xff]
        %v2690 = vld [vmem:[%s486 + $0x130] sm:$0xff]
        %v2691 = vld [vmem:[%s486 + $0x138] sm:$0xff]
        %v2692 = vld [vmem:[%s486 + $0x140] sm:$0xff]
        %v2693 = vld [vmem:[%s486 + $0x148] sm:$0xff]
        %v2694 = vld [vmem:[%s486 + $0x150] sm:$0xff]
        %v2695 = vld [vmem:[%s486 + $0x158] sm:$0xff]
        %v2696 = vld [vmem:[%s486 + $0x160] sm:$0xff]
        %v2697 = vld [vmem:[%s486 + $0x168] sm:$0xff]
        %v2698 = vld [vmem:[%s486 + $0x170] sm:$0xff]
        %v2699 = vld [vmem:[%s486 + $0x178] sm:$0xff]
        %v2700 = vld [vmem:[%s486 + $0x180] sm:$0xff]
        %v2701 = vld [vmem:[%s486 + $0x188] sm:$0xff]
        %v2702 = vld [vmem:[%s486 + $0x190] sm:$0xff]
        %v2703 = vld [vmem:[%s486 + $0x198] sm:$0xff]
        %v2704 = vld [vmem:[%s486 + $0x1a0] sm:$0xff]
        %v2705 = vld [vmem:[%s486 + $0x1a8] sm:$0xff]
        %v2706 = vld [vmem:[%s486 + $0x1b0] sm:$0xff]
        %v2707 = vld [vmem:[%s486 + $0x1b8] sm:$0xff]
        %v2708 = vld [vmem:[%s486 + $0x1c0] sm:$0xff]
        %v2709 = vld [vmem:[%s486 + $0x1c8] sm:$0xff]
        %v2710 = vld [vmem:[%s486 + $0x1d0] sm:$0xff]
        %v2711 = vld [vmem:[%s486 + $0x1d8] sm:$0xff]
        %v2712 = vld [vmem:[%s486 + $0x1e0] sm:$0xff]
        %v2713 = vld [vmem:[%s486 + $0x1e8] sm:$0xff]
        %v2714 = vld [vmem:[%s486 + $0x1f0] sm:$0xff]
        %v2715 = vld [vmem:[%s486 + $0x1f8] sm:$0xff]
        %2716 = vmatprep.subr.mxu0 0.0
        %2717 = vmatpush1.msra.mxu0 %v2667
        %2718 = vmatprep.subr.mxu0 0.0
        %2719 = vmatpush1.msra.mxu0 %v2666
        %2720 = vmatprep.subr.mxu0 0.0
        %2721 = vmatpush1.msra.mxu0 %v2665
        %2722 = vmatprep.subr.mxu0 0.0
        %2723 = vmatpush1.msra.mxu0 %v2664
        %2724 = vmatprep.subr.mxu0 0.0
        %2725 = vmatpush1.msra.mxu0 %v2663
        %2726 = vmatprep.subr.mxu0 0.0
        %2727 = vmatpush1.msra.mxu0 %v2662
        %2728 = vmatprep.subr.mxu0 0.0
        %2729 = vmatpush1.msra.mxu0 %v2661
        %2730 = vmatprep.subr.mxu0 0.0
        %2731 = vmatpush1.msra.mxu0 %v2660
        %2732 = vmatprep.subr.mxu0 0.0
        %2733 = vmatpush1.msra.mxu0 %v2659
        %2734 = vmatprep.subr.mxu0 0.0
        %2735 = vmatpush1.msra.mxu0 %v2658
        %2736 = vmatprep.subr.mxu0 0.0
        %2737 = vmatpush1.msra.mxu0 %v2657
        %2738 = vmatprep.subr.mxu0 0.0
        %2739 = vmatpush1.msra.mxu0 %v2656
        %2740 = vmatprep.subr.mxu0 0.0
        %2741 = vmatpush1.msra.mxu0 %v2655
        %2742 = vmatprep.subr.mxu0 0.0
        %2743 = vmatpush1.msra.mxu0 %v2654
        %2744 = vmatprep.subr.mxu0 0.0
        %2745 = vmatpush1.msra.mxu0 %v2653
        %2746 = vmatprep.subr.mxu0 0.0
        %2747 = vmatpush1.msra.mxu0 %v2652
        %2748 = vmatprep.subr.mxu0 0.0
        %2749 = vmatpush2.msra.mxu0 %v2683
        %2750 = vmatprep.subr.mxu0 0.0
        %2751 = vmatpush2.msra.mxu0 %v2682
        %2752 = vmatprep.subr.mxu0 0.0
        %2753 = vmatpush2.msra.mxu0 %v2681
        %2754 = vmatprep.subr.mxu0 0.0
        %2755 = vmatpush2.msra.mxu0 %v2680
        %2756 = vmatprep.subr.mxu0 0.0
        %2757 = vmatpush2.msra.mxu0 %v2679
        %2758 = vmatprep.subr.mxu0 0.0
        %2759 = vmatpush2.msra.mxu0 %v2678
        %2760 = vmatprep.subr.mxu0 0.0
        %2761 = vmatpush2.msra.mxu0 %v2677
        %2762 = vmatprep.subr.mxu0 0.0
        %2763 = vmatpush2.msra.mxu0 %v2676
        %2764 = vmatprep.subr.mxu0 0.0
        %2765 = vmatpush2.msra.mxu0 %v2675
        %2766 = vmatprep.subr.mxu0 0.0
        %2767 = vmatpush2.msra.mxu0 %v2674
        %2768 = vmatprep.subr.mxu0 0.0
        %2769 = vmatpush2.msra.mxu0 %v2673
        %2770 = vmatprep.subr.mxu0 0.0
        %2771 = vmatpush2.msra.mxu0 %v2672
        %2772 = vmatprep.subr.mxu0 0.0
        %2773 = vmatpush2.msra.mxu0 %v2671
        %2774 = vmatprep.subr.mxu0 0.0
        %2775 = vmatpush2.msra.mxu0 %v2670
        %2776 = vmatprep.subr.mxu0 0.0
        %2777 = vmatpush2.msra.mxu0 %v2669
        %2778 = vmatprep.subr.mxu0 0.0
        %2779 = vmatpush2.msra.mxu0 %v2668
        %2780 = vmatprep.mubr.f32.mxu0 %v2648
        %2781 = vmatmul.mubr.f32.gmra.mxu0 %v2647
        %v2782 = vpop.f32.mrf.mxu0
        %v2783 = vadd.f32 0.0, %v2782
        %v2784 = vpop.f32.mrf.mxu0
        %2785 = vdwg.mxu0
        %2786 = vmatprep.subr.mxu0 0.0
        %2787 = vmatpush1.msra.mxu0 %v2699
        %2788 = vmatprep.subr.mxu0 0.0
        %2789 = vmatpush1.msra.mxu0 %v2698
        %2790 = vmatprep.subr.mxu0 0.0
        %2791 = vmatpush1.msra.mxu0 %v2697
        %2792 = vmatprep.subr.mxu0 0.0
        %2793 = vmatpush1.msra.mxu0 %v2696
        %2794 = vmatprep.subr.mxu0 0.0
        %2795 = vmatpush1.msra.mxu0 %v2695
        %2796 = vmatprep.subr.mxu0 0.0
        %2797 = vmatpush1.msra.mxu0 %v2694
        %2798 = vmatprep.subr.mxu0 0.0
        %2799 = vmatpush1.msra.mxu0 %v2693
        %2800 = vmatprep.subr.mxu0 0.0
        %2801 = vmatpush1.msra.mxu0 %v2692
        %2802 = vmatprep.subr.mxu0 0.0
        %2803 = vmatpush1.msra.mxu0 %v2691
        %2804 = vmatprep.subr.mxu0 0.0
        %2805 = vmatpush1.msra.mxu0 %v2690
        %2806 = vmatprep.subr.mxu0 0.0
        %2807 = vmatpush1.msra.mxu0 %v2689
        %2808 = vmatprep.subr.mxu0 0.0
        %2809 = vmatpush1.msra.mxu0 %v2688
        %2810 = vmatprep.subr.mxu0 0.0
        %2811 = vmatpush1.msra.mxu0 %v2687
        %2812 = vmatprep.subr.mxu0 0.0
        %2813 = vmatpush1.msra.mxu0 %v2686
        %2814 = vmatprep.subr.mxu0 0.0
        %2815 = vmatpush1.msra.mxu0 %v2685
        %2816 = vmatprep.subr.mxu0 0.0
        %2817 = vmatpush1.msra.mxu0 %v2684
        %2818 = vmatprep.subr.mxu0 0.0
        %2819 = vmatpush2.msra.mxu0 %v2715
        %2820 = vmatprep.subr.mxu0 0.0
        %2821 = vmatpush2.msra.mxu0 %v2714
        %2822 = vmatprep.subr.mxu0 0.0
        %2823 = vmatpush2.msra.mxu0 %v2713
        %2824 = vmatprep.subr.mxu0 0.0
        %2825 = vmatpush2.msra.mxu0 %v2712
        %2826 = vmatprep.subr.mxu0 0.0
        %2827 = vmatpush2.msra.mxu0 %v2711
        %2828 = vmatprep.subr.mxu0 0.0
        %2829 = vmatpush2.msra.mxu0 %v2710
        %2830 = vmatprep.subr.mxu0 0.0
        %2831 = vmatpush2.msra.mxu0 %v2709
        %2832 = vmatprep.subr.mxu0 0.0
        %2833 = vmatpush2.msra.mxu0 %v2708
        %2834 = vmatprep.subr.mxu0 0.0
        %2835 = vmatpush2.msra.mxu0 %v2707
        %2836 = vmatprep.subr.mxu0 0.0
        %2837 = vmatpush2.msra.mxu0 %v2706
        %2838 = vmatprep.subr.mxu0 0.0
        %2839 = vmatpush2.msra.mxu0 %v2705
        %2840 = vmatprep.subr.mxu0 0.0
        %2841 = vmatpush2.msra.mxu0 %v2704
        %2842 = vmatprep.subr.mxu0 0.0
        %2843 = vmatpush2.msra.mxu0 %v2703
        %2844 = vmatprep.subr.mxu0 0.0
        %2845 = vmatpush2.msra.mxu0 %v2702
        %2846 = vmatprep.subr.mxu0 0.0
        %2847 = vmatpush2.msra.mxu0 %v2701
        %2848 = vmatprep.subr.mxu0 0.0
        %2849 = vmatpush2.msra.mxu0 %v2700
        %2850 = vmatprep.mubr.f32.mxu0 %v2650
        %2851 = vmatmul.mubr.f32.gmra.mxu0 %v2649
        %v2852 = vpop.f32.mrf.mxu0
        %v2853 = vadd.f32 %v2783, %v2852
        %v2854 = vpop.f32.mrf.mxu0
        %2855 = vdwg.mxu0
        %v2856 = vadd.f32 %v2651, %v2853
        %vm2857 = vcmask 130048
        %2858 = vst.msk [vmem:[#allocation2] sm:$0xff] %vm2857, %v2856
        %p2859 = scmp.eq.s32.totalorder %s28, 1
        // Predicated region
        $region89: #{epilogue_forward.1} parent=55 // pred_check
          %p2860 = pneg %p2859
        $region90: #{epilogue_forward.1} parent=55 // pred_check_branch
          %2862 = sbr.rel (%p2860) target = $region92
        $region91: #{epilogue_forward.1} parent=55 // pred_region
          %v2863 = vld [vmem:[#allocation2] sm:$0xff]
          %v2864 = vld [vmem:[#allocation11] sm:$0x1]
          %v2866 = vlaneseq
          %v2867 = vshrl.u32 %v2866, 7
          %v2868 = vsub.s32 0, %v2867
          %v2869 = vrot.slane %v2864, %v2868
          %v2871 = vadd.f32 %v2863, %v2869
          %vm2872 = vcmp.ge.f32.partialorder %v2871, 0.0
          %v2873 = vmul.f32 %v2871, 0.2
          %v2874 = vsel %vm2872, %v2871, %v2873
          %v2875 = vld [vmem:[#allocation12] sm:$0xff]
          %v2876 = vld [vmem:[#allocation12 + $0x8] sm:$0xff]
          %v2877 = vld [vmem:[#allocation14] sm:$0x1]
          %v2879 = vlaneseq
          %v2880 = vshrl.u32 %v2879, 7
          %v2881 = vsub.s32 0, %v2880
          %v2882 = vrot.slane %v2877, %v2881
          %v2885 = vsel %vm2857, %v2874, 0
          %2887 = vmatprep.subr.mxu0 0.0
          %2888 = vmatpush1.msra.mxu0 0.0
          %2889 = vmatprep.subr.mxu0 0.0
          %2890 = vmatpush1.msra.mxu0 0.0
          %2891 = vmatprep.subr.mxu0 0.0
          %2892 = vmatpush1.msra.mxu0 0.0
          %2893 = vmatprep.subr.mxu0 0.0
          %2894 = vmatpush1.msra.mxu0 0.0
          %2895 = vmatprep.subr.mxu0 0.0
          %2896 = vmatpush1.msra.mxu0 0.0
          %2897 = vmatprep.subr.mxu0 0.0
          %2898 = vmatpush1.msra.mxu0 0.0
          %2899 = vmatprep.subr.mxu0 0.0
          %2900 = vmatpush1.msra.mxu0 0.0
          %2901 = vmatprep.subr.mxu0 0.0
          %2902 = vmatpush1.msra.mxu0 0.0
          %2903 = vmatprep.subr.mxu0 0.0
          %2904 = vmatpush1.msra.mxu0 0.0
          %2905 = vmatprep.subr.mxu0 0.0
          %2906 = vmatpush1.msra.mxu0 0.0
          %2907 = vmatprep.subr.mxu0 0.0
          %2908 = vmatpush1.msra.mxu0 0.0
          %2909 = vmatprep.subr.mxu0 0.0
          %2910 = vmatpush1.msra.mxu0 0.0
          %2911 = vmatprep.subr.mxu0 0.0
          %2912 = vmatpush1.msra.mxu0 0.0
          %2913 = vmatprep.subr.mxu0 0.0
          %2914 = vmatpush1.msra.mxu0 0.0
          %2915 = vmatprep.subr.mxu0 0.0
          %2916 = vmatpush1.msra.mxu0 %v2876
          %2917 = vmatprep.subr.mxu0 0.0
          %2918 = vmatpush1.msra.mxu0 %v2875
          %2919 = vmatprep.subr.mxu0 0.0
          %2920 = vmatpush2.msra.mxu0 0.0
          %2921 = vmatprep.subr.mxu0 0.0
          %2922 = vmatpush2.msra.mxu0 0.0
          %2923 = vmatprep.subr.mxu0 0.0
          %2924 = vmatpush2.msra.mxu0 0.0
          %2925 = vmatprep.subr.mxu0 0.0
          %2926 = vmatpush2.msra.mxu0 0.0
          %2927 = vmatprep.subr.mxu0 0.0
          %2928 = vmatpush2.msra.mxu0 0.0
          %2929 = vmatprep.subr.mxu0 0.0
          %2930 = vmatpush2.msra.mxu0 0.0
          %2931 = vmatprep.subr.mxu0 0.0
          %2932 = vmatpush2.msra.mxu0 0.0
          %2933 = vmatprep.subr.mxu0 0.0
          %2934 = vmatpush2.msra.mxu0 0.0
          %2935 = vmatprep.subr.mxu0 0.0
          %2936 = vmatpush2.msra.mxu0 0.0
          %2937 = vmatprep.subr.mxu0 0.0
          %2938 = vmatpush2.msra.mxu0 0.0
          %2939 = vmatprep.subr.mxu0 0.0
          %2940 = vmatpush2.msra.mxu0 0.0
          %2941 = vmatprep.subr.mxu0 0.0
          %2942 = vmatpush2.msra.mxu0 0.0
          %2943 = vmatprep.subr.mxu0 0.0
          %2944 = vmatpush2.msra.mxu0 0.0
          %2945 = vmatprep.subr.mxu0 0.0
          %2946 = vmatpush2.msra.mxu0 0.0
          %2947 = vmatprep.subr.mxu0 0.0
          %2948 = vmatpush2.msra.mxu0 0.0
          %2949 = vmatprep.subr.mxu0 0.0
          %2950 = vmatpush2.msra.mxu0 0.0
          %2951 = vmatprep.mubr.f32.mxu0 0.0
          %2952 = vmatmul.mubr.f32.gmra.mxu0 %v2885
          %v2953 = vpop.f32.mrf.mxu0
          %v2954 = vadd.f32 %v2882, %v2953
          %v2955 = vpop.f32.mrf.mxu0
          %2956 = vdwg.mxu0
          %v2957 = vld [vmem:[#allocation4] sm:$0xff]
          %v2958 = vmul.f32 %v2957, %v2954
          %vm2959 = vcmask 80896
          %v2960 = vsel %vm2959, %v2958, 0.0
          %2961 = vadd.xlane.f32.xlu0 %v2960
          %v2962 = vpop.xlane.xlu0 %2961
          %vm2963 = vcmask 7168
          %2964 = vst.msk [vmem:[%s9] sm:$0xff] %vm2963, %v2962
        $region92: #{epilogue_forward.1} parent=55 // pred_fallthru
          _
        // Predicated region
        $region93: #{epilogue_forward.1} parent=55 // pred_check
          %p2965 = pneg %p250
        $region94: #{epilogue_forward.1} parent=55 // pred_check_branch
          %2967 = sbr.rel (%p2965) target = $region96
        $region95: #{epilogue_forward.1} parent=55 // pred_region
          _
        $region96: #{epilogue_forward.1} parent=55 // pred_fallthru
          _
        // Predicated region
        $region97: #{epilogue_forward.1} parent=55 // pred_check
          %p2968 = pneg %p250
        $region98: #{epilogue_forward.1} parent=55 // pred_check_branch
          %2970 = sbr.rel (%p2968) target = $region100
        $region99: #{epilogue_forward.1} parent=55 // pred_region
          _
        $region100: #{epilogue_forward.1} parent=55 // pred_fallthru
          _
      $region56: #{epilogue_forward.1} parent=5 // pred_fallthru
        _
      %p2971 = scmp.le.s32.totalorder 2, %s23
      // Predicated region
      $region101: #{epilogue_forward.1} parent=5 // pred_check
        %p2972 = pneg %p2971
      $region102: #{epilogue_forward.1} parent=5 // pred_check_branch
        %2974 = sbr.rel (%p2972) target = $region104
      $region103: #{epilogue_forward.1} parent=5 // pred_region
        %s2975 = ssub.s32 %s23, 2
      $region104: #{epilogue_forward.1} parent=5 // pred_fallthru
        _
    $region6: #{epilogue_forward.1} parent=1 // loop_footer
      %s27 = sadd.s32 1, %s23
    $region7: #{epilogue_forward.1} parent=1 // loop_footer_branch
      %22 = sbr.rel target = $region3
    $region8: #{epilogue_forward.1} parent=1 // loop_exit
      _
    %2976 = vsyncpa [#allocation5], 1
    %s2977 = scalar_lea.sflag [#allocation5], 1
    %2978 = vsyncpa %s2977, 1
    %2979 = vsyncpa [#allocation7], 1
    %s2980 = scalar_lea.sflag [#allocation7], 1
    %2981 = vsyncpa %s2980, 1
    %2982 = vsyncpa [#allocation10], 1
    %s2983 = scalar_lea.sflag [#allocation10], 1
    %2984 = vsyncpa %s2983, 1
    %2985 = vsyncpa [#allocation13], 1

</llo_original>
